<compile_context>
chip_gen: v7x
topology: tpu7x:2x2x1
jax: 0.10.0
libtpu: 0.0.40
codegen_flags: <defaults>
</compile_context>

<pallas_src>
import jax
import jax.numpy as jnp
import numpy as np
from jax.experimental import pallas as pl
from jax.experimental.pallas import tpu as pltpu

_HI = jax.lax.Precision.HIGHEST


def _round_up(x, m):
    return ((x + m - 1) // m) * m


# -----------------------------------------------------------------------------
# Kernels
# -----------------------------------------------------------------------------
def _mesh_conv_kernel_acc(z_ref, op_ref, z0_ref, out_ref, acc_ref):
    """Tiled GEMM with persistent f32 accumulator; grid = (m, n, k), k last."""
    k = pl.program_id(2)

    @pl.when(k == 0)
    def _init():
        acc_ref[...] = jnp.zeros_like(acc_ref)

    acc_ref[...] += jnp.dot(z_ref[...], op_ref[...],
                            preferred_element_type=jnp.float32)

    @pl.when(k == pl.num_programs(2) - 1)
    def _finalize():
        out_ref[...] = (acc_ref[...] + z0_ref[...]).astype(out_ref.dtype)


def _mesh_conv_kernel_noacc(z_ref, op_ref, z0_ref, out_ref):
    """Whole contraction fits in one block: straight GEMM + epilogue add."""
    out_ref[...] = (jnp.dot(z_ref[...], op_ref[...],
                            preferred_element_type=jnp.float32)
                    + z0_ref[...]).astype(out_ref.dtype)


# -----------------------------------------------------------------------------
# One-time (per mesh level) operator preparation -- cache the result!
# -----------------------------------------------------------------------------
def prepare_mesh_operators(G, L, F2V, EW, NS, op_dtype=jnp.bfloat16):
    """Fold + pad + stack the mesh operators once.

    Returns dict with the K-stacked operator [L^T ; D_ew^T ; D_ns^T] of shape
    (3*NVP, NVP) in `op_dtype`, plus sizes.  This is O(nv * nF * nv) work and
    must NOT be done per forward call.
    """
    f32 = jnp.float32
    G = jnp.asarray(G, f32)
    L = jnp.asarray(L, f32)
    F2V = jnp.asarray(F2V, f32)
    EW = jnp.asarray(EW, f32)
    NS = jnp.asarray(NS, f32)

    nF = EW.shape[0]
    nv = L.shape[1]
    nv_out = L.shape[0]
    assert G.shape == (3 * nF, nv)
    assert F2V.shape == (nv_out, nF)
    # TODO(synk): stride=2 (nv_out != nv) not implemented.
    assert nv_out == nv, "stride=2 path not implemented"

    # Algebraic fold: D = F2V @ (per-face tangent-weighted G)  -> (nv, nv).
    Gr = G.reshape(3, nF, nv)
    wg_ew = jnp.einsum('fk,kfn->fn', EW, Gr, precision=_HI)
    wg_ns = jnp.einsum('fk,kfn->fn', NS, Gr, precision=_HI)
    D_ew = jnp.einsum('mf,fn->mn', F2V, wg_ew, precision=_HI)
    D_ns = jnp.einsum('mf,fn->mn', F2V, wg_ns, precision=_HI)

    NVP = _round_up(nv, 512)

    def pad_t(op):  # transpose + zero-pad to (NVP, NVP)
        return jnp.pad(op.T, ((0, NVP - nv), (0, NVP - nv_out)))

    # Row order must match z column order: [laplacian | grad_ew | grad_ns].
    op_stack = jnp.concatenate([pad_t(L), pad_t(D_ew), pad_t(D_ns)], axis=0)
    op_stack = op_stack.astype(op_dtype)

    return dict(op_stack=op_stack, nv=nv, nv_out=nv_out, NVP=NVP)


# -----------------------------------------------------------------------------
# Forward
# -----------------------------------------------------------------------------
def mesh_conv(x, coeffs, bias, mesh_ops):
    """Pallas MeshConv forward (stride=1).

    x:        (B, C_in, nv) float32
    coeffs:   (C_out, C_in, 4)  coeff order: [identity, laplacian, ew, ns]
    bias:     (C_out,)
    mesh_ops: output of prepare_mesh_operators (cached per mesh level)
    returns   (B, C_out, nv) float32
    """
    f32 = jnp.float32
    x = jnp.asarray(x, f32)
    coeffs = jnp.asarray(coeffs, f32)
    bias = jnp.asarray(bias, f32)

    B, Cin, nv = x.shape
    Cout = coeffs.shape[0]
    assert nv == mesh_ops['nv']
    NVP = mesh_ops['NVP']
    op_stack = mesh_ops['op_stack']
    K = op_stack.shape[0]                       # 3 * NVP
    op_dtype = op_stack.dtype

    # ---- channel pre-mix (tiny) ----------------------------------------------
    # z_d = W_d @ x for the three operator paths; identity path gets the bias
    # folded in and is added in f32 in the kernel epilogue.
    z_ops = jnp.einsum('oid,bin->dbon', coeffs[:, :, 1:4], x, precision=_HI)
    z0 = jnp.einsum('oi,bin->bon', coeffs[:, :, 0], x, precision=_HI)
    z0 = z0 + bias[None, :, None]

    # ---- row (M) tiling --------------------------------------------------------
    M = B * Cout
    n_mt = -(-M // 512)                          # chunks of <= 512 rows
    tm = -(-M // n_mt)
    tm = _round_up(tm, 128) if tm >= 128 else _round_up(tm, 8)
    M_pad = n_mt * tm

    # z: (M_pad, 3*NVP), one NVP-wide slab per operator (matches op_stack rows).
    z_ops = jnp.pad(z_ops, ((0, 0), (0, 0), (0, 0), (0, NVP - nv)))
    z = jnp.transpose(z_ops, (1, 2, 0, 3)).reshape(M, 3 * NVP)
    z = jnp.pad(z, ((0, M_pad - M), (0, 0))).astype(op_dtype)

    z0 = jnp.pad(z0, ((0, 0), (0, 0), (0, NVP - nv))).reshape(M, NVP)
    z0 = jnp.pad(z0, ((0, M_pad - M), (0, 0)))   # stays f32 (epilogue only)

    # ---- lane (N) tiling -------------------------------------------------------
    tn = 512
    if n_mt * (NVP // tn) < 2:
        tn = 256                                 # give both v7x cores work

    cp = dict(vmem_limit_bytes=32 * 1024 * 1024)

    if K == 3 * 512:
        # Small mesh: single k-step, no accumulator, 2-D parallel grid.
        out = pl.pallas_call(
            _mesh_conv_kernel_noacc,
            out_shape=jax.ShapeDtypeStruct((M_pad, NVP), f32),
            grid_spec=pltpu.PrefetchScalarGridSpec(
                num_scalar_prefetch=0,
                grid=(n_mt, NVP // tn),
                in_specs=[
                    pl.BlockSpec((tm, K), lambda m, n: (m, 0)),    # z
                    pl.BlockSpec((K, tn), lambda m, n: (0, n)),    # op stack
                    pl.BlockSpec((tm, tn), lambda m, n: (m, n)),   # z0 (+bias)
                ],
                out_specs=pl.BlockSpec((tm, tn), lambda m, n: (m, n)),
            ),
            compiler_params=pltpu.CompilerParams(
                dimension_semantics=("parallel", "parallel"), **cp),
        )(z, op_stack, z0)
    else:
        tk = 512
        out = pl.pallas_call(
            _mesh_conv_kernel_acc,
            out_shape=jax.ShapeDtypeStruct((M_pad, NVP), f32),
            grid_spec=pltpu.PrefetchScalarGridSpec(
                num_scalar_prefetch=0,
                grid=(n_mt, NVP // tn, K // tk),
                in_specs=[
                    pl.BlockSpec((tm, tk), lambda m, n, k: (m, k)),   # z
                    pl.BlockSpec((tk, tn), lambda m, n, k: (k, n)),   # op stack
                    pl.BlockSpec((tm, tn), lambda m, n, k: (m, n)),   # z0
                ],
                out_specs=pl.BlockSpec((tm, tn), lambda m, n, k: (m, n)),
                scratch_shapes=[pltpu.VMEM((tm, tn), jnp.float32)],
            ),
            compiler_params=pltpu.CompilerParams(
                dimension_semantics=("parallel", "parallel", "arbitrary"), **cp),
        )(z, op_stack, z0)

    return out[:M].reshape(B, Cout, NVP)[:, :, :nv]


# -----------------------------------------------------------------------------
# Pure-JAX reference mirroring the PyTorch forward exactly (unfolded, f32)
# -----------------------------------------------------------------------------
def mesh_conv_ref(x, G, L, F2V, EW, NS, coeffs, bias):
    nF = EW.shape[0]
    nv_prev = L.shape[0]
    gf = jnp.einsum('fn,bcn->bcf', G, x, precision=_HI)          # (B,C,3F)
    B, C, _ = gf.shape
    gf = gf.reshape(B, C, 3, nF).transpose(0, 1, 3, 2)           # (B,C,F,3)
    lap = jnp.einsum('mn,bcn->bcm', L, x, precision=_HI)
    ident = x[..., :nv_prev]
    ew = jnp.sum(gf * EW, axis=-1)
    ns = jnp.sum(gf * NS, axis=-1)
    gv_ew = jnp.einsum('mf,bcf->bcm', F2V, ew, precision=_HI)
    gv_ns = jnp.einsum('mf,bcf->bcm', F2V, ns, precision=_HI)
    feat = jnp.stack([ident, lap, gv_ew, gv_ns], axis=-1)        # (B,C,nv,4)
    out = jnp.einsum('bind,oid->bon', feat, coeffs, precision=_HI)
    return out + bias[None, :, None]


if __name__ == "__main__":
    def run_case(key, B, Cin, Cout, nv, nF):
        kx, kG, kL, kF, kEW, kNS, kc, kb = jax.random.split(key, 8)
        x = jax.random.normal(kx, (B, Cin, nv), jnp.float32)
        # Synthetic (dense) mesh operators.
        G = 0.1 * jax.random.normal(kG, (3 * nF, nv), jnp.float32)
        L = 0.1 * jax.random.normal(kL, (nv, nv), jnp.float32)
        F2V = 0.1 * jax.random.normal(kF, (nv, nF), jnp.float32)
        EW = jax.random.normal(kEW, (nF, 3), jnp.float32)
        NS = jax.random.normal(kNS, (nF, 3), jnp.float32)
        # Parameter init matching _MeshConv.set_coeffs: U(-stdv, stdv).
        ncoeff = 4
        stdv = 1.0 / np.sqrt(Cin * ncoeff)
        coeffs = jax.random.uniform(kc, (Cout, Cin, ncoeff), jnp.float32,
                                    -stdv, stdv)
        bias = jax.random.uniform(kb, (Cout,), jnp.float32, -stdv, stdv)

        mesh_ops = prepare_mesh_operators(G, L, F2V, EW, NS)  # cached per level
        out = jax.block_until_ready(mesh_conv(x, coeffs, bias, mesh_ops))
        assert out.shape == (B, Cout, nv), out.shape

        ref = jax.block_until_ready(
            mesh_conv_ref(x, G, L, F2V, EW, NS, coeffs, bias))
        # bf16 streamed operands (f32 accumulation) -> tolerance relative to
        # the overall output scale.
        scale = float(jnp.max(jnp.abs(ref)))
        np.testing.assert_allclose(np.asarray(out), np.asarray(ref),
                                   rtol=2e-2, atol=2e-2 * scale)

    key = jax.random.PRNGKey(0)
    k1, k2 = jax.random.split(key)
    # Small mesh -> NVP=512, single-k-step no-accumulator path.
    run_case(k1, B=2, Cin=4, Cout=8, nv=384, nF=768)
    # Larger mesh -> NVP=1024, tiled (m, n, k) accumulator path.
    run_case(k2, B=2, Cin=3, Cout=5, nv=640, nF=1280)
    print("KERNEL_OK")
</pallas_src>

<mosaic_0001>
module attributes {stable_mosaic.version = 11 : i64} {
  func.func @_mesh_conv_kernel_noacc(%arg0: i32, %arg1: i32, %arg2: memref<16x1536xbf16, #tpu.memory_space<vmem>>, %arg3: memref<1536x256xbf16, #tpu.memory_space<vmem>>, %arg4: memref<16x256xf32, #tpu.memory_space<vmem>>, %arg5: memref<16x256xf32, #tpu.memory_space<vmem>>) attributes {dimension_semantics = [#tpu.dimension_semantics<parallel>, #tpu.dimension_semantics<parallel>], iteration_bounds = array<i64: 1, 2>, scalar_prefetch = 0 : i64, scratch_operands = 0 : i64, tpu.core_type = #tpu.core_type<tc>, window_params = [{transform_indices = @transform_0, window_bounds = array<i64: 16, 1536>}, {transform_indices = @transform_1, window_bounds = array<i64: 1536, 256>}, {transform_indices = @transform_2, window_bounds = array<i64: 16, 256>}, {transform_indices = @transform_3, window_bounds = array<i64: 16, 256>}]} {
    %c0 = arith.constant 0 : index
    %c0_0 = arith.constant 0 : index
    %0 = vector.load %arg2[%c0, %c0_0] : memref<16x1536xbf16, #tpu.memory_space<vmem>>, vector<16x1536xbf16>
    %c0_1 = arith.constant 0 : index
    %c0_2 = arith.constant 0 : index
    %1 = vector.load %arg3[%c0_1, %c0_2] : memref<1536x256xbf16, #tpu.memory_space<vmem>>, vector<1536x256xbf16>
    %cst = arith.constant dense<0.000000e+00> : vector<16x256xf32>
    %2 = tpu.matmul %0, %1, %cst {dimension_numbers = #tpu.dot_dimension_numbers<[1], [0], [0], [1], [0, 0, 1, 1], [], []>} : vector<16x1536xbf16>, vector<1536x256xbf16>, vector<16x256xf32> -> vector<16x256xf32>
    %c0_3 = arith.constant 0 : index
    %c0_4 = arith.constant 0 : index
    %3 = vector.load %arg4[%c0_3, %c0_4] : memref<16x256xf32, #tpu.memory_space<vmem>>, vector<16x256xf32>
    %4 = arith.addf %2, %3 : vector<16x256xf32>
    %c0_5 = arith.constant 0 : index
    %c0_6 = arith.constant 0 : index
    %5 = vector.load %arg5[%c0_5, %c0_6] : memref<16x256xf32, #tpu.memory_space<vmem>>, vector<16x256xf32>
    tpu.vector_store %arg5[%c0_5, %c0_6], %4 {strides = array<i32>} : memref<16x256xf32, #tpu.memory_space<vmem>>, vector<16x256xf32>,
    return
  }
  func.func @transform_0(%arg0: i32, %arg1: i32) -> (i32, i32) {
    %c0_i32 = arith.constant 0 : i32
    %c0_i32_0 = arith.constant 0 : i32
    return %arg0, %c0_i32 : i32, i32
  }
  func.func @transform_1(%arg0: i32, %arg1: i32) -> (i32, i32) {
    %c0_i32 = arith.constant 0 : i32
    %c0_i32_0 = arith.constant 0 : i32
    return %c0_i32, %arg1 : i32, i32
  }
  func.func @transform_2(%arg0: i32, %arg1: i32) -> (i32, i32) {
    %c0_i32 = arith.constant 0 : i32
    return %arg0, %arg1 : i32, i32
  }
  func.func @transform_3(%arg0: i32, %arg1: i32) -> (i32, i32) {
    %c0_i32 = arith.constant 0 : i32
    return %arg0, %arg1 : i32, i32
  }
}

</mosaic_0001>

<llo_original>
// kernel: tpu_custom_call.1
$region0: #{tpu_custom_call.1}
  #allocation0 [shape = 'u32[]', space=smem, size = 0x4, offset = 0x4, fixed_abs, tag = 'smem constant byte address 0x4 - core index']
  #allocation1 [shape = 'u32[144,128]{1,0:T(1,128)}', space=vmem, size = 0x12000, scoped, tag = 'internal scratch']
  %s0 = inlined_call_operand.hbm [shape: bf16[16,1536], index: 0, kind: input, shape index: {}]
  %s1 = inlined_call_operand.hbm [shape: bf16[1536,512], index: 1, kind: input, shape index: {}]
  %s2 = inlined_call_operand.hbm [shape: f32[16,512], index: 2, kind: input, shape index: {}]
  %s3 = inlined_call_operand.hbm [shape: f32[16,512], index: 3, kind: output, shape index: {}]
  %s4 = sld [smem:[#allocation0]]
  $region57: #{tpu_custom_call.1} parent=0
    _
  %s6 = ssub.s32 1, %s4
  %s7 = scalar_select 0, %s6, %s4
  $region1: #{tpu_custom_call.1} parent=0
    #allocation2 [shape = 'u8[49152]{0}', space=vmem, size = 0xc000, scoped, tag = 'input window, operand 0, single buffered']
    #allocation3 [shape = 's32[2]{0}', space=sflag, size = 0x8, scoped, tag = 'scoped memory for tpu_custom_call.1']
    #allocation4 [shape = 's32[2]{0}', space=sflag, size = 0x8, scoped, tag = 'scoped memory for tpu_custom_call.1']
    #allocation5 [shape = 'u8[1572864]{0}', space=vmem, size = 0x180000, scoped, tag = 'input window, operand 1']
    #allocation6 [shape = 's32[2]{0}', space=sflag, size = 0x8, scoped, tag = 'scoped memory for tpu_custom_call.1']
    #allocation7 [shape = 'u8[32768]{0}', space=vmem, size = 0x8000, scoped, tag = 'input window, operand 2']
    #allocation8 [shape = 'u8[32768]{0}', space=vmem, size = 0x8000, scoped, tag = 'output window, operand 0']
    %8 = vsyncpa [#allocation3], 0
    %9 = vsyncpa [#allocation6], 0
    %s10 = scalar_lea.sflag [#allocation6], 1
    %11 = vsyncpa %s10, 0
    %12 = vsyncpa [#allocation4], 0
    %s13 = scalar_lea.sflag [#allocation4], 1
    %14 = vsyncpa %s13, 0
    loop: start=0, step=1, limit=4
    $region2: #{tpu_custom_call.1} parent=1 // loop_pre_header
      _
    $region3: #{tpu_custom_call.1} parent=1 // loop_header
      %s16 = sphi 0, %s20
      %p17 = scmp.ge.s32.totalorder %s16, 4
      %s23 = sphi 0, %s35
      %s24 = sphi 0, %s31
      %s25 = sphi 0, %s23
      %s26 = sphi 0, %s24
      %s27 = sphi 0, %s25
      %s28 = sphi 0, %s26
      %s38 = sphi 0, %s40
      %s41 = sphi 0, %s38
      %s42 = sphi 0, %s41
      %s58 = sphi 0, %s42
      %s64 = sphi 0, %s66
      %s67 = sphi 0, %s64
      %s68 = sphi 0, %s67
      %s84 = sphi 0, %s68
      %s92 = sphi 0, %s94
      %s95 = sphi 0, %s92
      %s96 = sphi 0, %s95
      %s112 = sphi 0, %s96
      %s120 = sphi 0, %s122
      %s123 = sphi 0, %s120
      %s124 = sphi 0, %s123
      %s140 = sphi 0, %s124
    $region4: #{tpu_custom_call.1} parent=1 // loop_header_branch
      %19 = sbr.rel (%p17) target = $region8
    $region5: #{tpu_custom_call.1} parent=1 // loop_body
      %s21 = ssub.s32 %s16, 1
      %s22 = ssub.s32 %s16, 2
      %s29 = sadd.s32 1, %s24
      %p30 = scmp.ge.s32.totalorder %s29, 2
      %s31 = scalar_select %p30, 0, %s29
      %s32 = sadd.s32 1, %s23
      %s33 = scalar_select %p30, %s32, %s23
      %p34 = scmp.ge.s32.totalorder %s33, 1
      %s35 = scalar_select %p34, 0, %s33
      %s36 = ssub.s32 %s23, %s35
      %p37 = scmp.eq.s32.totalorder %s36, 0
      %s39 = sadd.s32 %s38, 1
      %s40 = scalar_select %p37, %s38, %s39
      %p43 = pneg %p37
      %p44 = scmp.eq.s32.totalorder %s16, 1
      %p45 = por %p43, %p44
      %p46 = scmp.ne.s32.totalorder %s38, %s41
      %p47 = scmp.eq.s32.totalorder %s16, 0
      %p48 = por %p46, %p47
      %p49 = scmp.ne.s32.totalorder %s38, %s41
      %p50 = scmp.eq.s32.totalorder %s21, 1
      %p51 = por %p49, %p50
      %p52 = scmp.ne.s32.totalorder %s41, %s42
      %p53 = scmp.eq.s32.totalorder %s21, 0
      %p54 = por %p52, %p53
      %p55 = scmp.ne.s32.totalorder %s41, %s42
      %p56 = scmp.eq.s32.totalorder %s22, 1
      %p57 = por %p55, %p56
      %p59 = scmp.ne.s32.totalorder %s42, %s58
      %p60 = scmp.eq.s32.totalorder %s22, 0
      %p61 = por %p59, %p60
      %s62 = ssub.s32 %s24, %s31
      %p63 = scmp.eq.s32.totalorder %s62, 0
      %s65 = sadd.s32 %s64, 1
      %s66 = scalar_select %p63, %s64, %s65
      %p69 = pneg %p63
      %p70 = scmp.eq.s32.totalorder %s16, 1
      %p71 = por %p69, %p70
      %p72 = scmp.ne.s32.totalorder %s64, %s67
      %p73 = scmp.eq.s32.totalorder %s16, 0
      %p74 = por %p72, %p73
      %p75 = scmp.ne.s32.totalorder %s64, %s67
      %p76 = scmp.eq.s32.totalorder %s21, 1
      %p77 = por %p75, %p76
      %p78 = scmp.ne.s32.totalorder %s67, %s68
      %p79 = scmp.eq.s32.totalorder %s21, 0
      %p80 = por %p78, %p79
      %p81 = scmp.ne.s32.totalorder %s67, %s68
      %p82 = scmp.eq.s32.totalorder %s22, 1
      %p83 = por %p81, %p82
      %p85 = scmp.ne.s32.totalorder %s68, %s84
      %p86 = scmp.eq.s32.totalorder %s22, 0
      %p87 = por %p85, %p86
      %s88 = ssub.s32 %s23, %s35
      %s89 = ssub.s32 %s24, %s31
      %s90 = sor.u32 %s88, %s89
      %p91 = scmp.eq.s32.totalorder %s90, 0
      %s93 = sadd.s32 %s92, 1
      %s94 = scalar_select %p91, %s92, %s93
      %p97 = pneg %p91
      %p98 = scmp.eq.s32.totalorder %s16, 1
      %p99 = por %p97, %p98
      %p100 = scmp.ne.s32.totalorder %s92, %s95
      %p101 = scmp.eq.s32.totalorder %s16, 0
      %p102 = por %p100, %p101
      %p103 = scmp.ne.s32.totalorder %s92, %s95
      %p104 = scmp.eq.s32.totalorder %s21, 1
      %p105 = por %p103, %p104
      %p106 = scmp.ne.s32.totalorder %s95, %s96
      %p107 = scmp.eq.s32.totalorder %s21, 0
      %p108 = por %p106, %p107
      %p109 = scmp.ne.s32.totalorder %s95, %s96
      %p110 = scmp.eq.s32.totalorder %s22, 1
      %p111 = por %p109, %p110
      %p113 = scmp.ne.s32.totalorder %s96, %s112
      %p114 = scmp.eq.s32.totalorder %s22, 0
      %p115 = por %p113, %p114
      %s116 = ssub.s32 %s23, %s35
      %s117 = ssub.s32 %s24, %s31
      %s118 = sor.u32 %s116, %s117
      %p119 = scmp.eq.s32.totalorder %s118, 0
      %s121 = sadd.s32 %s120, 1
      %s122 = scalar_select %p119, %s120, %s121
      %p125 = pneg %p119
      %p126 = scmp.eq.s32.totalorder %s16, 1
      %p127 = por %p125, %p126
      %p128 = scmp.ne.s32.totalorder %s120, %s123
      %p129 = scmp.eq.s32.totalorder %s16, 0
      %p130 = por %p128, %p129
      %p131 = scmp.ne.s32.totalorder %s120, %s123
      %p132 = scmp.eq.s32.totalorder %s21, 1
      %p133 = por %p131, %p132
      %p134 = scmp.ne.s32.totalorder %s123, %s124
      %p135 = scmp.eq.s32.totalorder %s21, 0
      %p136 = por %p134, %p135
      %p137 = scmp.ne.s32.totalorder %s123, %s124
      %p138 = scmp.eq.s32.totalorder %s22, 1
      %p139 = por %p137, %p138
      %p141 = scmp.ne.s32.totalorder %s124, %s140
      %p142 = scmp.eq.s32.totalorder %s22, 0
      %p143 = por %p141, %p142
      %p144 = scmp.le.s32.totalorder 1, %s16
      %p145 = scmp.lt.s32.totalorder %s16, 3
      %p146 = pnand %p144, %p145
      %p147 = pneg %p146
      // Predicated region
      $region9: #{tpu_custom_call.1} parent=5 // pred_check
        _
      $region10: #{tpu_custom_call.1} parent=5 // pred_check_branch
        %149 = sbr.rel (%p146) target = $region12
      $region11: #{tpu_custom_call.1} parent=5 // pred_region
        %s150 = ssub.s32 %s16, 1
        // Predicated region
        $region13: #{tpu_custom_call.1} parent=11 // pred_check
          %p151 = pneg %p54
        $region14: #{tpu_custom_call.1} parent=11 // pred_check_branch
          %153 = sbr.rel (%p151) target = $region16
        $region15: #{tpu_custom_call.1} parent=11 // pred_region
          %s154 = smul.u32 2, %s25
          %s156 = ssub.s32 1536, 1536
          %157 = vsyncadd [#allocation3], %s156
          %s158 = smul.addr %s154, 12
          %s159 = smul.addr %s158, 64
          %s160 = scalar_lea.hbm %s0, %s159
          %s161 = sshll.u32 [#allocation2], 4
          %s162 = int_to_ptr.vmem [resolvable:$true] %s161
          %167 = dma.hbm_to_vmem [thread:$0]  %s160, 1536, %s162, [#allocation3], 768, 768, 48
        $region16: #{tpu_custom_call.1} parent=11 // pred_fallthru
          _
      $region12: #{tpu_custom_call.1} parent=5 // pred_fallthru
        _
      %p168 = scmp.lt.s32.totalorder %s16, 2
      // Predicated region
      $region17: #{tpu_custom_call.1} parent=5 // pred_check
        %p169 = pneg %p168
      $region18: #{tpu_custom_call.1} parent=5 // pred_check_branch
        %171 = sbr.rel (%p169) target = $region20
      $region19: #{tpu_custom_call.1} parent=5 // pred_region
        // Predicated region
        $region21: #{tpu_custom_call.1} parent=19 // pred_check
          %p172 = pneg %p74
        $region22: #{tpu_custom_call.1} parent=19 // pred_check_branch
          %174 = sbr.rel (%p172) target = $region24
        $region23: #{tpu_custom_call.1} parent=19 // pred_region
          %s175 = sand.u32 %s16, 1
          %s176 = scalar_lea.sflag [#allocation6], %s175
          %s177 = sand.u32 %s64, 1
          %s178 = smul.addr %s177, 1536
          %s179 = scalar_lea.vmem [#allocation5], %s178
          %s180 = smul.u32 2, %s24
          %s182 = ssub.s32 24576, 24576
          %183 = vsyncadd %s176, %s182
          %s184 = smul.addr %s180, 64
          %s185 = scalar_lea.hbm %s1, %s184
          %s186 = sshll.u32 %s179, 4
          %s187 = int_to_ptr.vmem [resolvable:$true] %s186
          %192 = dma.hbm_to_vmem [thread:$0]  %s185, 24576, %s187, %s176, 256, 128, 8
        $region24: #{tpu_custom_call.1} parent=19 // pred_fallthru
          _
        // Predicated region
        $region25: #{tpu_custom_call.1} parent=19 // pred_check
          %p193 = pneg %p102
        $region26: #{tpu_custom_call.1} parent=19 // pred_check_branch
          %195 = sbr.rel (%p193) target = $region28
        $region27: #{tpu_custom_call.1} parent=19 // pred_region
          %s196 = sand.u32 %s16, 1
          %s197 = scalar_lea.sflag [#allocation6], %s196
          %s198 = sand.u32 %s92, 1
          %s199 = smul.addr %s198, 32
          %s200 = scalar_lea.vmem [#allocation7], %s199
          %s201 = smul.u32 2, %s23
          %s202 = smul.u32 2, %s24
          %s204 = ssub.s32 512, 512
          %205 = vsyncadd %s197, %s204
          %s206 = smul.addr %s201, 4
          %s207 = sadd.s32 %s202, %s206
          %s208 = smul.addr %s207, 128
          %s209 = scalar_lea.hbm %s2, %s208
          %s210 = sshll.u32 %s200, 4
          %s211 = int_to_ptr.vmem [resolvable:$true] %s210
          %216 = dma.hbm_to_vmem [thread:$0]  %s209, 512, %s211, %s197, 512, 256, 16
        $region28: #{tpu_custom_call.1} parent=19 // pred_fallthru
          _
      $region20: #{tpu_custom_call.1} parent=5 // pred_fallthru
        _
      %p217 = scmp.le.s32.totalorder 1, %s16
      %p218 = scmp.lt.s32.totalorder %s16, 3
      %p219 = pnand %p217, %p218
      %p220 = pneg %p219
      // Predicated region
      $region29: #{tpu_custom_call.1} parent=5 // pred_check
        _
      $region30: #{tpu_custom_call.1} parent=5 // pred_check_branch
        %222 = sbr.rel (%p219) target = $region32
      $region31: #{tpu_custom_call.1} parent=5 // pred_region
        %s223 = ssub.s32 %s16, 1
        // Predicated region
        $region33: #{tpu_custom_call.1} parent=31 // pred_check
          %p224 = pneg %p54
        $region34: #{tpu_custom_call.1} parent=31 // pred_check_branch
          %226 = sbr.rel (%p224) target = $region36
        $region35: #{tpu_custom_call.1} parent=31 // pred_region
          %227 = dma.done [#allocation3], 1536
        $region36: #{tpu_custom_call.1} parent=31 // pred_fallthru
          _
        %s228 = sand.u32 %s21, 1
        %s229 = scalar_lea.sflag [#allocation6], %s228
        %s230 = sand.u32 %s67, 1
        %s231 = smul.addr %s230, 1536
        %s232 = scalar_lea.vmem [#allocation5], %s231
        // Predicated region
        $region37: #{tpu_custom_call.1} parent=31 // pred_check
          %p233 = pneg %p80
        $region38: #{tpu_custom_call.1} parent=31 // pred_check_branch
          %235 = sbr.rel (%p233) target = $region40
        $region39: #{tpu_custom_call.1} parent=31 // pred_region
          %236 = dma.done %s229, 24576
        $region40: #{tpu_custom_call.1} parent=31 // pred_fallthru
          _
        %s237 = sand.u32 %s21, 1
        %s238 = scalar_lea.sflag [#allocation6], %s237
        %s239 = sand.u32 %s95, 1
        %s240 = smul.addr %s239, 32
        %s241 = scalar_lea.vmem [#allocation7], %s240
        // Predicated region
        $region41: #{tpu_custom_call.1} parent=31 // pred_check
          %p242 = pneg %p108
        $region42: #{tpu_custom_call.1} parent=31 // pred_check_branch
          %244 = sbr.rel (%p242) target = $region44
        $region43: #{tpu_custom_call.1} parent=31 // pred_region
          %245 = dma.done %s238, 512
        $region44: #{tpu_custom_call.1} parent=31 // pred_fallthru
          _
        %p246 = pneg %p54
        %p247 = pneg %p51
        %s248 = sand.u32 %s21, 1
        %s249 = scalar_lea.sflag [#allocation6], %s248
        %s250 = sand.u32 %s67, 1
        %s251 = smul.addr %s250, 1536
        %s252 = scalar_lea.vmem [#allocation5], %s251
        %p253 = pneg %p80
        %p254 = pneg %p77
        %s255 = sand.u32 %s21, 1
        %s256 = scalar_lea.sflag [#allocation6], %s255
        %s257 = sand.u32 %s95, 1
        %s258 = smul.addr %s257, 32
        %s259 = scalar_lea.vmem [#allocation7], %s258
        %p260 = pneg %p108
        %p261 = pneg %p105
        %p262 = pneg %p136
        %p263 = pneg %p133
        %s264 = sand.u32 %s123, 1
        %s265 = scalar_lea.sflag [#allocation4], %s264
        %s266 = sand.u32 %s123, 1
        %s267 = smul.addr %s266, 32
        %s268 = scalar_lea.vmem [#allocation8], %s267
        %s269 = smul.u32 2, %s25
        %s270 = smul.u32 2, %s26
        %s271 = smul.u32 2, %s25
        %s272 = smul.u32 2, %s26
        %s273 = smul.u32 2, %s25
        %s274 = smul.u32 2, %s26
        %v275 = vld [vmem:[#allocation2] sm:$0xff]
        %v276 = vld [vmem:[#allocation2 + $0x8] sm:$0xff]
        %v277 = vld [vmem:[#allocation2 + $0x10] sm:$0xff]
        %v278 = vld [vmem:[#allocation2 + $0x18] sm:$0xff]
        %v279 = vld [vmem:[#allocation2 + $0x20] sm:$0xff]
        %v280 = vld [vmem:[#allocation2 + $0x28] sm:$0xff]
        %v281 = vld [vmem:[#allocation2 + $0x30] sm:$0xff]
        %v282 = vld [vmem:[#allocation2 + $0x38] sm:$0xff]
        %v283 = vld [vmem:[#allocation2 + $0x40] sm:$0xff]
        %v284 = vld [vmem:[#allocation2 + $0x48] sm:$0xff]
        %v285 = vld [vmem:[#allocation2 + $0x50] sm:$0xff]
        %v286 = vld [vmem:[#allocation2 + $0x58] sm:$0xff]
        %v287 = vld [vmem:[%s232] sm:$0xff]
        %v288 = vld [vmem:[%s232 + $0x8] sm:$0xff]
        %v289 = vld [vmem:[%s232 + $0x10] sm:$0xff]
        %v290 = vld [vmem:[%s232 + $0x18] sm:$0xff]
        %v291 = vld [vmem:[%s232 + $0x20] sm:$0xff]
        %v292 = vld [vmem:[%s232 + $0x28] sm:$0xff]
        %v293 = vld [vmem:[%s232 + $0x30] sm:$0xff]
        %v294 = vld [vmem:[%s232 + $0x38] sm:$0xff]
        %v295 = vld [vmem:[%s232 + $0x40] sm:$0xff]
        %v296 = vld [vmem:[%s232 + $0x48] sm:$0xff]
        %v297 = vld [vmem:[%s232 + $0x50] sm:$0xff]
        %v298 = vld [vmem:[%s232 + $0x58] sm:$0xff]
        %v299 = vld [vmem:[%s232 + $0x60] sm:$0xff]
        %v300 = vld [vmem:[%s232 + $0x68] sm:$0xff]
        %v301 = vld [vmem:[%s232 + $0x70] sm:$0xff]
        %v302 = vld [vmem:[%s232 + $0x78] sm:$0xff]
        %v303 = vld [vmem:[%s232 + $0x80] sm:$0xff]
        %v304 = vld [vmem:[%s232 + $0x88] sm:$0xff]
        %v305 = vld [vmem:[%s232 + $0x90] sm:$0xff]
        %v306 = vld [vmem:[%s232 + $0x98] sm:$0xff]
        %v307 = vld [vmem:[%s232 + $0xa0] sm:$0xff]
        %v308 = vld [vmem:[%s232 + $0xa8] sm:$0xff]
        %v309 = vld [vmem:[%s232 + $0xb0] sm:$0xff]
        %v310 = vld [vmem:[%s232 + $0xb8] sm:$0xff]
        %v311 = vld [vmem:[%s232 + $0xc0] sm:$0xff]
        %v312 = vld [vmem:[%s232 + $0xc8] sm:$0xff]
        %v313 = vld [vmem:[%s232 + $0xd0] sm:$0xff]
        %v314 = vld [vmem:[%s232 + $0xd8] sm:$0xff]
        %v315 = vld [vmem:[%s232 + $0xe0] sm:$0xff]
        %v316 = vld [vmem:[%s232 + $0xe8] sm:$0xff]
        %v317 = vld [vmem:[%s232 + $0xf0] sm:$0xff]
        %v318 = vld [vmem:[%s232 + $0xf8] sm:$0xff]
        %v319 = vld [vmem:[%s232 + $0x100] sm:$0xff]
        %v320 = vld [vmem:[%s232 + $0x108] sm:$0xff]
        %v321 = vld [vmem:[%s232 + $0x110] sm:$0xff]
        %v322 = vld [vmem:[%s232 + $0x118] sm:$0xff]
        %v323 = vld [vmem:[%s232 + $0x120] sm:$0xff]
        %v324 = vld [vmem:[%s232 + $0x128] sm:$0xff]
        %v325 = vld [vmem:[%s232 + $0x130] sm:$0xff]
        %v326 = vld [vmem:[%s232 + $0x138] sm:$0xff]
        %v327 = vld [vmem:[%s232 + $0x140] sm:$0xff]
        %v328 = vld [vmem:[%s232 + $0x148] sm:$0xff]
        %v329 = vld [vmem:[%s232 + $0x150] sm:$0xff]
        %v330 = vld [vmem:[%s232 + $0x158] sm:$0xff]
        %v331 = vld [vmem:[%s232 + $0x160] sm:$0xff]
        %v332 = vld [vmem:[%s232 + $0x168] sm:$0xff]
        %v333 = vld [vmem:[%s232 + $0x170] sm:$0xff]
        %v334 = vld [vmem:[%s232 + $0x178] sm:$0xff]
        %v335 = vld [vmem:[%s232 + $0x180] sm:$0xff]
        %v336 = vld [vmem:[%s232 + $0x188] sm:$0xff]
        %v337 = vld [vmem:[%s232 + $0x190] sm:$0xff]
        %v338 = vld [vmem:[%s232 + $0x198] sm:$0xff]
        %v339 = vld [vmem:[%s232 + $0x1a0] sm:$0xff]
        %v340 = vld [vmem:[%s232 + $0x1a8] sm:$0xff]
        %v341 = vld [vmem:[%s232 + $0x1b0] sm:$0xff]
        %v342 = vld [vmem:[%s232 + $0x1b8] sm:$0xff]
        %v343 = vld [vmem:[%s232 + $0x1c0] sm:$0xff]
        %v344 = vld [vmem:[%s232 + $0x1c8] sm:$0xff]
        %v345 = vld [vmem:[%s232 + $0x1d0] sm:$0xff]
        %v346 = vld [vmem:[%s232 + $0x1d8] sm:$0xff]
        %v347 = vld [vmem:[%s232 + $0x1e0] sm:$0xff]
        %v348 = vld [vmem:[%s232 + $0x1e8] sm:$0xff]
        %v349 = vld [vmem:[%s232 + $0x1f0] sm:$0xff]
        %v350 = vld [vmem:[%s232 + $0x1f8] sm:$0xff]
        %v351 = vld [vmem:[%s232 + $0x200] sm:$0xff]
        %v352 = vld [vmem:[%s232 + $0x208] sm:$0xff]
        %v353 = vld [vmem:[%s232 + $0x210] sm:$0xff]
        %v354 = vld [vmem:[%s232 + $0x218] sm:$0xff]
        %v355 = vld [vmem:[%s232 + $0x220] sm:$0xff]
        %v356 = vld [vmem:[%s232 + $0x228] sm:$0xff]
        %v357 = vld [vmem:[%s232 + $0x230] sm:$0xff]
        %v358 = vld [vmem:[%s232 + $0x238] sm:$0xff]
        %v359 = vld [vmem:[%s232 + $0x240] sm:$0xff]
        %v360 = vld [vmem:[%s232 + $0x248] sm:$0xff]
        %v361 = vld [vmem:[%s232 + $0x250] sm:$0xff]
        %v362 = vld [vmem:[%s232 + $0x258] sm:$0xff]
        %v363 = vld [vmem:[%s232 + $0x260] sm:$0xff]
        %v364 = vld [vmem:[%s232 + $0x268] sm:$0xff]
        %v365 = vld [vmem:[%s232 + $0x270] sm:$0xff]
        %v366 = vld [vmem:[%s232 + $0x278] sm:$0xff]
        %v367 = vld [vmem:[%s232 + $0x280] sm:$0xff]
        %v368 = vld [vmem:[%s232 + $0x288] sm:$0xff]
        %v369 = vld [vmem:[%s232 + $0x290] sm:$0xff]
        %v370 = vld [vmem:[%s232 + $0x298] sm:$0xff]
        %v371 = vld [vmem:[%s232 + $0x2a0] sm:$0xff]
        %v372 = vld [vmem:[%s232 + $0x2a8] sm:$0xff]
        %v373 = vld [vmem:[%s232 + $0x2b0] sm:$0xff]
        %v374 = vld [vmem:[%s232 + $0x2b8] sm:$0xff]
        %v375 = vld [vmem:[%s232 + $0x2c0] sm:$0xff]
        %v376 = vld [vmem:[%s232 + $0x2c8] sm:$0xff]
        %v377 = vld [vmem:[%s232 + $0x2d0] sm:$0xff]
        %v378 = vld [vmem:[%s232 + $0x2d8] sm:$0xff]
        %v379 = vld [vmem:[%s232 + $0x2e0] sm:$0xff]
        %v380 = vld [vmem:[%s232 + $0x2e8] sm:$0xff]
        %v381 = vld [vmem:[%s232 + $0x2f0] sm:$0xff]
        %v382 = vld [vmem:[%s232 + $0x2f8] sm:$0xff]
        %v383 = vld [vmem:[%s232 + $0x300] sm:$0xff]
        %v384 = vld [vmem:[%s232 + $0x308] sm:$0xff]
        %v385 = vld [vmem:[%s232 + $0x310] sm:$0xff]
        %v386 = vld [vmem:[%s232 + $0x318] sm:$0xff]
        %v387 = vld [vmem:[%s232 + $0x320] sm:$0xff]
        %v388 = vld [vmem:[%s232 + $0x328] sm:$0xff]
        %v389 = vld [vmem:[%s232 + $0x330] sm:$0xff]
        %v390 = vld [vmem:[%s232 + $0x338] sm:$0xff]
        %v391 = vld [vmem:[%s232 + $0x340] sm:$0xff]
        %v392 = vld [vmem:[%s232 + $0x348] sm:$0xff]
        %v393 = vld [vmem:[%s232 + $0x350] sm:$0xff]
        %v394 = vld [vmem:[%s232 + $0x358] sm:$0xff]
        %v395 = vld [vmem:[%s232 + $0x360] sm:$0xff]
        %v396 = vld [vmem:[%s232 + $0x368] sm:$0xff]
        %v397 = vld [vmem:[%s232 + $0x370] sm:$0xff]
        %v398 = vld [vmem:[%s232 + $0x378] sm:$0xff]
        %v399 = vld [vmem:[%s232 + $0x380] sm:$0xff]
        %v400 = vld [vmem:[%s232 + $0x388] sm:$0xff]
        %v401 = vld [vmem:[%s232 + $0x390] sm:$0xff]
        %v402 = vld [vmem:[%s232 + $0x398] sm:$0xff]
        %v403 = vld [vmem:[%s232 + $0x3a0] sm:$0xff]
        %v404 = vld [vmem:[%s232 + $0x3a8] sm:$0xff]
        %v405 = vld [vmem:[%s232 + $0x3b0] sm:$0xff]
        %v406 = vld [vmem:[%s232 + $0x3b8] sm:$0xff]
        %v407 = vld [vmem:[%s232 + $0x3c0] sm:$0xff]
        %v408 = vld [vmem:[%s232 + $0x3c8] sm:$0xff]
        %v409 = vld [vmem:[%s232 + $0x3d0] sm:$0xff]
        %v410 = vld [vmem:[%s232 + $0x3d8] sm:$0xff]
        %v411 = vld [vmem:[%s232 + $0x3e0] sm:$0xff]
        %v412 = vld [vmem:[%s232 + $0x3e8] sm:$0xff]
        %v413 = vld [vmem:[%s232 + $0x3f0] sm:$0xff]
        %v414 = vld [vmem:[%s232 + $0x3f8] sm:$0xff]
        %v415 = vld [vmem:[%s232 + $0x400] sm:$0xff]
        %v416 = vld [vmem:[%s232 + $0x408] sm:$0xff]
        %v417 = vld [vmem:[%s232 + $0x410] sm:$0xff]
        %v418 = vld [vmem:[%s232 + $0x418] sm:$0xff]
        %v419 = vld [vmem:[%s232 + $0x420] sm:$0xff]
        %v420 = vld [vmem:[%s232 + $0x428] sm:$0xff]
        %v421 = vld [vmem:[%s232 + $0x430] sm:$0xff]
        %v422 = vld [vmem:[%s232 + $0x438] sm:$0xff]
        %v423 = vld [vmem:[%s232 + $0x440] sm:$0xff]
        %v424 = vld [vmem:[%s232 + $0x448] sm:$0xff]
        %v425 = vld [vmem:[%s232 + $0x450] sm:$0xff]
        %v426 = vld [vmem:[%s232 + $0x458] sm:$0xff]
        %v427 = vld [vmem:[%s232 + $0x460] sm:$0xff]
        %v428 = vld [vmem:[%s232 + $0x468] sm:$0xff]
        %v429 = vld [vmem:[%s232 + $0x470] sm:$0xff]
        %v430 = vld [vmem:[%s232 + $0x478] sm:$0xff]
        %v431 = vld [vmem:[%s232 + $0x480] sm:$0xff]
        %v432 = vld [vmem:[%s232 + $0x488] sm:$0xff]
        %v433 = vld [vmem:[%s232 + $0x490] sm:$0xff]
        %v434 = vld [vmem:[%s232 + $0x498] sm:$0xff]
        %v435 = vld [vmem:[%s232 + $0x4a0] sm:$0xff]
        %v436 = vld [vmem:[%s232 + $0x4a8] sm:$0xff]
        %v437 = vld [vmem:[%s232 + $0x4b0] sm:$0xff]
        %v438 = vld [vmem:[%s232 + $0x4b8] sm:$0xff]
        %v439 = vld [vmem:[%s232 + $0x4c0] sm:$0xff]
        %v440 = vld [vmem:[%s232 + $0x4c8] sm:$0xff]
        %v441 = vld [vmem:[%s232 + $0x4d0] sm:$0xff]
        %v442 = vld [vmem:[%s232 + $0x4d8] sm:$0xff]
        %v443 = vld [vmem:[%s232 + $0x4e0] sm:$0xff]
        %v444 = vld [vmem:[%s232 + $0x4e8] sm:$0xff]
        %v445 = vld [vmem:[%s232 + $0x4f0] sm:$0xff]
        %v446 = vld [vmem:[%s232 + $0x4f8] sm:$0xff]
        %v447 = vld [vmem:[%s232 + $0x500] sm:$0xff]
        %v448 = vld [vmem:[%s232 + $0x508] sm:$0xff]
        %v449 = vld [vmem:[%s232 + $0x510] sm:$0xff]
        %v450 = vld [vmem:[%s232 + $0x518] sm:$0xff]
        %v451 = vld [vmem:[%s232 + $0x520] sm:$0xff]
        %v452 = vld [vmem:[%s232 + $0x528] sm:$0xff]
        %v453 = vld [vmem:[%s232 + $0x530] sm:$0xff]
        %v454 = vld [vmem:[%s232 + $0x538] sm:$0xff]
        %v455 = vld [vmem:[%s232 + $0x540] sm:$0xff]
        %v456 = vld [vmem:[%s232 + $0x548] sm:$0xff]
        %v457 = vld [vmem:[%s232 + $0x550] sm:$0xff]
        %v458 = vld [vmem:[%s232 + $0x558] sm:$0xff]
        %v459 = vld [vmem:[%s232 + $0x560] sm:$0xff]
        %v460 = vld [vmem:[%s232 + $0x568] sm:$0xff]
        %v461 = vld [vmem:[%s232 + $0x570] sm:$0xff]
        %v462 = vld [vmem:[%s232 + $0x578] sm:$0xff]
        %v463 = vld [vmem:[%s232 + $0x580] sm:$0xff]
        %v464 = vld [vmem:[%s232 + $0x588] sm:$0xff]
        %v465 = vld [vmem:[%s232 + $0x590] sm:$0xff]
        %v466 = vld [vmem:[%s232 + $0x598] sm:$0xff]
        %v467 = vld [vmem:[%s232 + $0x5a0] sm:$0xff]
        %v468 = vld [vmem:[%s232 + $0x5a8] sm:$0xff]
        %v469 = vld [vmem:[%s232 + $0x5b0] sm:$0xff]
        %v470 = vld [vmem:[%s232 + $0x5b8] sm:$0xff]
        %v471 = vld [vmem:[%s232 + $0x5c0] sm:$0xff]
        %v472 = vld [vmem:[%s232 + $0x5c8] sm:$0xff]
        %v473 = vld [vmem:[%s232 + $0x5d0] sm:$0xff]
        %v474 = vld [vmem:[%s232 + $0x5d8] sm:$0xff]
        %v475 = vld [vmem:[%s232 + $0x5e0] sm:$0xff]
        %v476 = vld [vmem:[%s232 + $0x5e8] sm:$0xff]
        %v477 = vld [vmem:[%s232 + $0x5f0] sm:$0xff]
        %v478 = vld [vmem:[%s232 + $0x5f8] sm:$0xff]
        %v479 = vld [vmem:[%s241] sm:$0xff]
        %v480 = vld [vmem:[%s241 + $0x8] sm:$0xff]
        %v481 = vld [vmem:[%s241 + $0x10] sm:$0xff]
        %v482 = vld [vmem:[%s241 + $0x18] sm:$0xff]
        %v495 = vunpack.c.l.b16 %v275
        %v496 = vunpack.c.h.b16 %v275
        %v497 = vunpack.c.l.b16 %v276
        %v498 = vunpack.c.h.b16 %v276
        %v499 = vunpack.c.l.b16 %v277
        %v500 = vunpack.c.h.b16 %v277
        %v501 = vunpack.c.l.b16 %v278
        %v502 = vunpack.c.h.b16 %v278
        %v503 = vunpack.c.l.b16 %v279
        %v504 = vunpack.c.h.b16 %v279
        %v505 = vunpack.c.l.b16 %v280
        %v506 = vunpack.c.h.b16 %v280
        %v507 = vunpack.c.l.b16 %v281
        %v508 = vunpack.c.h.b16 %v281
        %v509 = vunpack.c.l.b16 %v282
        %v510 = vunpack.c.h.b16 %v282
        %v511 = vunpack.c.l.b16 %v283
        %v512 = vunpack.c.h.b16 %v283
        %v513 = vunpack.c.l.b16 %v284
        %v514 = vunpack.c.h.b16 %v284
        %v515 = vunpack.c.l.b16 %v285
        %v516 = vunpack.c.h.b16 %v285
        %v517 = vunpack.c.l.b16 %v286
        %v518 = vunpack.c.h.b16 %v286
        %v519 = vpack.c.b16 %v507, %v495
        %v520 = vpack.c.b16 %v508, %v496
        %v521 = vpack.c.b16 %v509, %v497
        %v522 = vpack.c.b16 %v510, %v498
        %v523 = vpack.c.b16 %v511, %v499
        %v524 = vpack.c.b16 %v512, %v500
        %v525 = vpack.c.b16 %v513, %v501
        %v526 = vpack.c.b16 %v514, %v502
        %v527 = vpack.c.b16 %v515, %v503
        %v528 = vpack.c.b16 %v516, %v504
        %v529 = vpack.c.b16 %v517, %v505
        %v530 = vpack.c.b16 %v518, %v506
        %v735 = vunpack.c.l.b16 %v287
        %v736 = vunpack.c.h.b16 %v287
        %v737 = vunpack.c.l.b16 %v288
        %v738 = vunpack.c.h.b16 %v288
        %v739 = vunpack.c.l.b16 %v289
        %v740 = vunpack.c.h.b16 %v289
        %v741 = vunpack.c.l.b16 %v290
        %v742 = vunpack.c.h.b16 %v290
        %v743 = vunpack.c.l.b16 %v291
        %v744 = vunpack.c.h.b16 %v291
        %v745 = vunpack.c.l.b16 %v292
        %v746 = vunpack.c.h.b16 %v292
        %v747 = vunpack.c.l.b16 %v293
        %v748 = vunpack.c.h.b16 %v293
        %v749 = vunpack.c.l.b16 %v294
        %v750 = vunpack.c.h.b16 %v294
        %v751 = vunpack.c.l.b16 %v295
        %v752 = vunpack.c.h.b16 %v295
        %v753 = vunpack.c.l.b16 %v296
        %v754 = vunpack.c.h.b16 %v296
        %v755 = vunpack.c.l.b16 %v297
        %v756 = vunpack.c.h.b16 %v297
        %v757 = vunpack.c.l.b16 %v298
        %v758 = vunpack.c.h.b16 %v298
        %v759 = vunpack.c.l.b16 %v299
        %v760 = vunpack.c.h.b16 %v299
        %v761 = vunpack.c.l.b16 %v300
        %v762 = vunpack.c.h.b16 %v300
        %v763 = vunpack.c.l.b16 %v301
        %v764 = vunpack.c.h.b16 %v301
        %v765 = vunpack.c.l.b16 %v302
        %v766 = vunpack.c.h.b16 %v302
        %v767 = vunpack.c.l.b16 %v303
        %v768 = vunpack.c.h.b16 %v303
        %v769 = vunpack.c.l.b16 %v304
        %v770 = vunpack.c.h.b16 %v304
        %v771 = vunpack.c.l.b16 %v305
        %v772 = vunpack.c.h.b16 %v305
        %v773 = vunpack.c.l.b16 %v306
        %v774 = vunpack.c.h.b16 %v306
        %v775 = vunpack.c.l.b16 %v307
        %v776 = vunpack.c.h.b16 %v307
        %v777 = vunpack.c.l.b16 %v308
        %v778 = vunpack.c.h.b16 %v308
        %v779 = vunpack.c.l.b16 %v309
        %v780 = vunpack.c.h.b16 %v309
        %v781 = vunpack.c.l.b16 %v310
        %v782 = vunpack.c.h.b16 %v310
        %v783 = vunpack.c.l.b16 %v311
        %v784 = vunpack.c.h.b16 %v311
        %v785 = vunpack.c.l.b16 %v312
        %v786 = vunpack.c.h.b16 %v312
        %v787 = vunpack.c.l.b16 %v313
        %v788 = vunpack.c.h.b16 %v313
        %v789 = vunpack.c.l.b16 %v314
        %v790 = vunpack.c.h.b16 %v314
        %v791 = vunpack.c.l.b16 %v315
        %v792 = vunpack.c.h.b16 %v315
        %v793 = vunpack.c.l.b16 %v316
        %v794 = vunpack.c.h.b16 %v316
        %v795 = vunpack.c.l.b16 %v317
        %v796 = vunpack.c.h.b16 %v317
        %v797 = vunpack.c.l.b16 %v318
        %v798 = vunpack.c.h.b16 %v318
        %v799 = vunpack.c.l.b16 %v319
        %v800 = vunpack.c.h.b16 %v319
        %v801 = vunpack.c.l.b16 %v320
        %v802 = vunpack.c.h.b16 %v320
        %v803 = vunpack.c.l.b16 %v321
        %v804 = vunpack.c.h.b16 %v321
        %v805 = vunpack.c.l.b16 %v322
        %v806 = vunpack.c.h.b16 %v322
        %v807 = vunpack.c.l.b16 %v323
        %v808 = vunpack.c.h.b16 %v323
        %v809 = vunpack.c.l.b16 %v324
        %v810 = vunpack.c.h.b16 %v324
        %v811 = vunpack.c.l.b16 %v325
        %v812 = vunpack.c.h.b16 %v325
        %v813 = vunpack.c.l.b16 %v326
        %v814 = vunpack.c.h.b16 %v326
        %v815 = vunpack.c.l.b16 %v327
        %v816 = vunpack.c.h.b16 %v327
        %v817 = vunpack.c.l.b16 %v328
        %v818 = vunpack.c.h.b16 %v328
        %v819 = vunpack.c.l.b16 %v329
        %v820 = vunpack.c.h.b16 %v329
        %v821 = vunpack.c.l.b16 %v330
        %v822 = vunpack.c.h.b16 %v330
        %v823 = vunpack.c.l.b16 %v331
        %v824 = vunpack.c.h.b16 %v331
        %v825 = vunpack.c.l.b16 %v332
        %v826 = vunpack.c.h.b16 %v332
        %v827 = vunpack.c.l.b16 %v333
        %v828 = vunpack.c.h.b16 %v333
        %v829 = vunpack.c.l.b16 %v334
        %v830 = vunpack.c.h.b16 %v334
        %v831 = vunpack.c.l.b16 %v335
        %v832 = vunpack.c.h.b16 %v335
        %v833 = vunpack.c.l.b16 %v336
        %v834 = vunpack.c.h.b16 %v336
        %v835 = vunpack.c.l.b16 %v337
        %v836 = vunpack.c.h.b16 %v337
        %v837 = vunpack.c.l.b16 %v338
        %v838 = vunpack.c.h.b16 %v338
        %v839 = vunpack.c.l.b16 %v339
        %v840 = vunpack.c.h.b16 %v339
        %v841 = vunpack.c.l.b16 %v340
        %v842 = vunpack.c.h.b16 %v340
        %v843 = vunpack.c.l.b16 %v341
        %v844 = vunpack.c.h.b16 %v341
        %v845 = vunpack.c.l.b16 %v342
        %v846 = vunpack.c.h.b16 %v342
        %v847 = vunpack.c.l.b16 %v343
        %v848 = vunpack.c.h.b16 %v343
        %v849 = vunpack.c.l.b16 %v344
        %v850 = vunpack.c.h.b16 %v344
        %v851 = vunpack.c.l.b16 %v345
        %v852 = vunpack.c.h.b16 %v345
        %v853 = vunpack.c.l.b16 %v346
        %v854 = vunpack.c.h.b16 %v346
        %v855 = vunpack.c.l.b16 %v347
        %v856 = vunpack.c.h.b16 %v347
        %v857 = vunpack.c.l.b16 %v348
        %v858 = vunpack.c.h.b16 %v348
        %v859 = vunpack.c.l.b16 %v349
        %v860 = vunpack.c.h.b16 %v349
        %v861 = vunpack.c.l.b16 %v350
        %v862 = vunpack.c.h.b16 %v350
        %v863 = vunpack.c.l.b16 %v351
        %v864 = vunpack.c.h.b16 %v351
        %v865 = vunpack.c.l.b16 %v352
        %v866 = vunpack.c.h.b16 %v352
        %v867 = vunpack.c.l.b16 %v353
        %v868 = vunpack.c.h.b16 %v353
        %v869 = vunpack.c.l.b16 %v354
        %v870 = vunpack.c.h.b16 %v354
        %v871 = vunpack.c.l.b16 %v355
        %v872 = vunpack.c.h.b16 %v355
        %v873 = vunpack.c.l.b16 %v356
        %v874 = vunpack.c.h.b16 %v356
        %v875 = vunpack.c.l.b16 %v357
        %v876 = vunpack.c.h.b16 %v357
        %v877 = vunpack.c.l.b16 %v358
        %v878 = vunpack.c.h.b16 %v358
        %v879 = vunpack.c.l.b16 %v359
        %v880 = vunpack.c.h.b16 %v359
        %v881 = vunpack.c.l.b16 %v360
        %v882 = vunpack.c.h.b16 %v360
        %v883 = vunpack.c.l.b16 %v361
        %v884 = vunpack.c.h.b16 %v361
        %v885 = vunpack.c.l.b16 %v362
        %v886 = vunpack.c.h.b16 %v362
        %v887 = vunpack.c.l.b16 %v363
        %v888 = vunpack.c.h.b16 %v363
        %v889 = vunpack.c.l.b16 %v364
        %v890 = vunpack.c.h.b16 %v364
        %v891 = vunpack.c.l.b16 %v365
        %v892 = vunpack.c.h.b16 %v365
        %v893 = vunpack.c.l.b16 %v366
        %v894 = vunpack.c.h.b16 %v366
        %v895 = vunpack.c.l.b16 %v367
        %v896 = vunpack.c.h.b16 %v367
        %v897 = vunpack.c.l.b16 %v368
        %v898 = vunpack.c.h.b16 %v368
        %v899 = vunpack.c.l.b16 %v369
        %v900 = vunpack.c.h.b16 %v369
        %v901 = vunpack.c.l.b16 %v370
        %v902 = vunpack.c.h.b16 %v370
        %v903 = vunpack.c.l.b16 %v371
        %v904 = vunpack.c.h.b16 %v371
        %v905 = vunpack.c.l.b16 %v372
        %v906 = vunpack.c.h.b16 %v372
        %v907 = vunpack.c.l.b16 %v373
        %v908 = vunpack.c.h.b16 %v373
        %v909 = vunpack.c.l.b16 %v374
        %v910 = vunpack.c.h.b16 %v374
        %v911 = vunpack.c.l.b16 %v375
        %v912 = vunpack.c.h.b16 %v375
        %v913 = vunpack.c.l.b16 %v376
        %v914 = vunpack.c.h.b16 %v376
        %v915 = vunpack.c.l.b16 %v377
        %v916 = vunpack.c.h.b16 %v377
        %v917 = vunpack.c.l.b16 %v378
        %v918 = vunpack.c.h.b16 %v378
        %v919 = vunpack.c.l.b16 %v379
        %v920 = vunpack.c.h.b16 %v379
        %v921 = vunpack.c.l.b16 %v380
        %v922 = vunpack.c.h.b16 %v380
        %v923 = vunpack.c.l.b16 %v381
        %v924 = vunpack.c.h.b16 %v381
        %v925 = vunpack.c.l.b16 %v382
        %v926 = vunpack.c.h.b16 %v382
        %v927 = vunpack.c.l.b16 %v383
        %v928 = vunpack.c.h.b16 %v383
        %v929 = vunpack.c.l.b16 %v384
        %v930 = vunpack.c.h.b16 %v384
        %v931 = vunpack.c.l.b16 %v385
        %v932 = vunpack.c.h.b16 %v385
        %v933 = vunpack.c.l.b16 %v386
        %v934 = vunpack.c.h.b16 %v386
        %v935 = vunpack.c.l.b16 %v387
        %v936 = vunpack.c.h.b16 %v387
        %v937 = vunpack.c.l.b16 %v388
        %v938 = vunpack.c.h.b16 %v388
        %v939 = vunpack.c.l.b16 %v389
        %v940 = vunpack.c.h.b16 %v389
        %v941 = vunpack.c.l.b16 %v390
        %v942 = vunpack.c.h.b16 %v390
        %v943 = vunpack.c.l.b16 %v391
        %v944 = vunpack.c.h.b16 %v391
        %v945 = vunpack.c.l.b16 %v392
        %v946 = vunpack.c.h.b16 %v392
        %v947 = vunpack.c.l.b16 %v393
        %v948 = vunpack.c.h.b16 %v393
        %v949 = vunpack.c.l.b16 %v394
        %v950 = vunpack.c.h.b16 %v394
        %v951 = vunpack.c.l.b16 %v395
        %v952 = vunpack.c.h.b16 %v395
        %v953 = vunpack.c.l.b16 %v396
        %v954 = vunpack.c.h.b16 %v396
        %v955 = vunpack.c.l.b16 %v397
        %v956 = vunpack.c.h.b16 %v397
        %v957 = vunpack.c.l.b16 %v398
        %v958 = vunpack.c.h.b16 %v398
        %v959 = vunpack.c.l.b16 %v399
        %v960 = vunpack.c.h.b16 %v399
        %v961 = vunpack.c.l.b16 %v400
        %v962 = vunpack.c.h.b16 %v400
        %v963 = vunpack.c.l.b16 %v401
        %v964 = vunpack.c.h.b16 %v401
        %v965 = vunpack.c.l.b16 %v402
        %v966 = vunpack.c.h.b16 %v402
        %v967 = vunpack.c.l.b16 %v403
        %v968 = vunpack.c.h.b16 %v403
        %v969 = vunpack.c.l.b16 %v404
        %v970 = vunpack.c.h.b16 %v404
        %v971 = vunpack.c.l.b16 %v405
        %v972 = vunpack.c.h.b16 %v405
        %v973 = vunpack.c.l.b16 %v406
        %v974 = vunpack.c.h.b16 %v406
        %v975 = vunpack.c.l.b16 %v407
        %v976 = vunpack.c.h.b16 %v407
        %v977 = vunpack.c.l.b16 %v408
        %v978 = vunpack.c.h.b16 %v408
        %v979 = vunpack.c.l.b16 %v409
        %v980 = vunpack.c.h.b16 %v409
        %v981 = vunpack.c.l.b16 %v410
        %v982 = vunpack.c.h.b16 %v410
        %v983 = vunpack.c.l.b16 %v411
        %v984 = vunpack.c.h.b16 %v411
        %v985 = vunpack.c.l.b16 %v412
        %v986 = vunpack.c.h.b16 %v412
        %v987 = vunpack.c.l.b16 %v413
        %v988 = vunpack.c.h.b16 %v413
        %v989 = vunpack.c.l.b16 %v414
        %v990 = vunpack.c.h.b16 %v414
        %v991 = vunpack.c.l.b16 %v415
        %v992 = vunpack.c.h.b16 %v415
        %v993 = vunpack.c.l.b16 %v416
        %v994 = vunpack.c.h.b16 %v416
        %v995 = vunpack.c.l.b16 %v417
        %v996 = vunpack.c.h.b16 %v417
        %v997 = vunpack.c.l.b16 %v418
        %v998 = vunpack.c.h.b16 %v418
        %v999 = vunpack.c.l.b16 %v419
        %v1000 = vunpack.c.h.b16 %v419
        %v1001 = vunpack.c.l.b16 %v420
        %v1002 = vunpack.c.h.b16 %v420
        %v1003 = vunpack.c.l.b16 %v421
        %v1004 = vunpack.c.h.b16 %v421
        %v1005 = vunpack.c.l.b16 %v422
        %v1006 = vunpack.c.h.b16 %v422
        %v1007 = vunpack.c.l.b16 %v423
        %v1008 = vunpack.c.h.b16 %v423
        %v1009 = vunpack.c.l.b16 %v424
        %v1010 = vunpack.c.h.b16 %v424
        %v1011 = vunpack.c.l.b16 %v425
        %v1012 = vunpack.c.h.b16 %v425
        %v1013 = vunpack.c.l.b16 %v426
        %v1014 = vunpack.c.h.b16 %v426
        %v1015 = vunpack.c.l.b16 %v427
        %v1016 = vunpack.c.h.b16 %v427
        %v1017 = vunpack.c.l.b16 %v428
        %v1018 = vunpack.c.h.b16 %v428
        %v1019 = vunpack.c.l.b16 %v429
        %v1020 = vunpack.c.h.b16 %v429
        %v1021 = vunpack.c.l.b16 %v430
        %v1022 = vunpack.c.h.b16 %v430
        %v1023 = vunpack.c.l.b16 %v431
        %v1024 = vunpack.c.h.b16 %v431
        %v1025 = vunpack.c.l.b16 %v432
        %v1026 = vunpack.c.h.b16 %v432
        %v1027 = vunpack.c.l.b16 %v433
        %v1028 = vunpack.c.h.b16 %v433
        %v1029 = vunpack.c.l.b16 %v434
        %v1030 = vunpack.c.h.b16 %v434
        %v1031 = vunpack.c.l.b16 %v435
        %v1032 = vunpack.c.h.b16 %v435
        %v1033 = vunpack.c.l.b16 %v436
        %v1034 = vunpack.c.h.b16 %v436
        %v1035 = vunpack.c.l.b16 %v437
        %v1036 = vunpack.c.h.b16 %v437
        %v1037 = vunpack.c.l.b16 %v438
        %v1038 = vunpack.c.h.b16 %v438
        %v1039 = vunpack.c.l.b16 %v439
        %v1040 = vunpack.c.h.b16 %v439
        %v1041 = vunpack.c.l.b16 %v440
        %v1042 = vunpack.c.h.b16 %v440
        %v1043 = vunpack.c.l.b16 %v441
        %v1044 = vunpack.c.h.b16 %v441
        %v1045 = vunpack.c.l.b16 %v442
        %v1046 = vunpack.c.h.b16 %v442
        %v1047 = vunpack.c.l.b16 %v443
        %v1048 = vunpack.c.h.b16 %v443
        %v1049 = vunpack.c.l.b16 %v444
        %v1050 = vunpack.c.h.b16 %v444
        %v1051 = vunpack.c.l.b16 %v445
        %v1052 = vunpack.c.h.b16 %v445
        %v1053 = vunpack.c.l.b16 %v446
        %v1054 = vunpack.c.h.b16 %v446
        %v1055 = vunpack.c.l.b16 %v447
        %v1056 = vunpack.c.h.b16 %v447
        %v1057 = vunpack.c.l.b16 %v448
        %v1058 = vunpack.c.h.b16 %v448
        %v1059 = vunpack.c.l.b16 %v449
        %v1060 = vunpack.c.h.b16 %v449
        %v1061 = vunpack.c.l.b16 %v450
        %v1062 = vunpack.c.h.b16 %v450
        %v1063 = vunpack.c.l.b16 %v451
        %v1064 = vunpack.c.h.b16 %v451
        %v1065 = vunpack.c.l.b16 %v452
        %v1066 = vunpack.c.h.b16 %v452
        %v1067 = vunpack.c.l.b16 %v453
        %v1068 = vunpack.c.h.b16 %v453
        %v1069 = vunpack.c.l.b16 %v454
        %v1070 = vunpack.c.h.b16 %v454
        %v1071 = vunpack.c.l.b16 %v455
        %v1072 = vunpack.c.h.b16 %v455
        %v1073 = vunpack.c.l.b16 %v456
        %v1074 = vunpack.c.h.b16 %v456
        %v1075 = vunpack.c.l.b16 %v457
        %v1076 = vunpack.c.h.b16 %v457
        %v1077 = vunpack.c.l.b16 %v458
        %v1078 = vunpack.c.h.b16 %v458
        %v1079 = vunpack.c.l.b16 %v459
        %v1080 = vunpack.c.h.b16 %v459
        %v1081 = vunpack.c.l.b16 %v460
        %v1082 = vunpack.c.h.b16 %v460
        %v1083 = vunpack.c.l.b16 %v461
        %v1084 = vunpack.c.h.b16 %v461
        %v1085 = vunpack.c.l.b16 %v462
        %v1086 = vunpack.c.h.b16 %v462
        %v1087 = vunpack.c.l.b16 %v463
        %v1088 = vunpack.c.h.b16 %v463
        %v1089 = vunpack.c.l.b16 %v464
        %v1090 = vunpack.c.h.b16 %v464
        %v1091 = vunpack.c.l.b16 %v465
        %v1092 = vunpack.c.h.b16 %v465
        %v1093 = vunpack.c.l.b16 %v466
        %v1094 = vunpack.c.h.b16 %v466
        %v1095 = vunpack.c.l.b16 %v467
        %v1096 = vunpack.c.h.b16 %v467
        %v1097 = vunpack.c.l.b16 %v468
        %v1098 = vunpack.c.h.b16 %v468
        %v1099 = vunpack.c.l.b16 %v469
        %v1100 = vunpack.c.h.b16 %v469
        %v1101 = vunpack.c.l.b16 %v470
        %v1102 = vunpack.c.h.b16 %v470
        %v1103 = vunpack.c.l.b16 %v471
        %v1104 = vunpack.c.h.b16 %v471
        %v1105 = vunpack.c.l.b16 %v472
        %v1106 = vunpack.c.h.b16 %v472
        %v1107 = vunpack.c.l.b16 %v473
        %v1108 = vunpack.c.h.b16 %v473
        %v1109 = vunpack.c.l.b16 %v474
        %v1110 = vunpack.c.h.b16 %v474
        %v1111 = vunpack.c.l.b16 %v475
        %v1112 = vunpack.c.h.b16 %v475
        %v1113 = vunpack.c.l.b16 %v476
        %v1114 = vunpack.c.h.b16 %v476
        %v1115 = vunpack.c.l.b16 %v477
        %v1116 = vunpack.c.h.b16 %v477
        %v1117 = vunpack.c.l.b16 %v478
        %v1118 = vunpack.c.h.b16 %v478
        %v1119 = vpack.c.b16 %v737, %v735
        %v1120 = vpack.c.b16 %v738, %v736
        %v1121 = vpack.c.b16 %v741, %v739
        %v1122 = vpack.c.b16 %v742, %v740
        %v1123 = vpack.c.b16 %v745, %v743
        %v1124 = vpack.c.b16 %v746, %v744
        %v1125 = vpack.c.b16 %v749, %v747
        %v1126 = vpack.c.b16 %v750, %v748
        %v1127 = vpack.c.b16 %v753, %v751
        %v1128 = vpack.c.b16 %v754, %v752
        %v1129 = vpack.c.b16 %v757, %v755
        %v1130 = vpack.c.b16 %v758, %v756
        %v1131 = vpack.c.b16 %v761, %v759
        %v1132 = vpack.c.b16 %v762, %v760
        %v1133 = vpack.c.b16 %v765, %v763
        %v1134 = vpack.c.b16 %v766, %v764
        %v1135 = vpack.c.b16 %v769, %v767
        %v1136 = vpack.c.b16 %v770, %v768
        %v1137 = vpack.c.b16 %v773, %v771
        %v1138 = vpack.c.b16 %v774, %v772
        %v1139 = vpack.c.b16 %v777, %v775
        %v1140 = vpack.c.b16 %v778, %v776
        %v1141 = vpack.c.b16 %v781, %v779
        %v1142 = vpack.c.b16 %v782, %v780
        %v1143 = vpack.c.b16 %v785, %v783
        %v1144 = vpack.c.b16 %v786, %v784
        %v1145 = vpack.c.b16 %v789, %v787
        %v1146 = vpack.c.b16 %v790, %v788
        %v1147 = vpack.c.b16 %v793, %v791
        %v1148 = vpack.c.b16 %v794, %v792
        %v1149 = vpack.c.b16 %v797, %v795
        %v1150 = vpack.c.b16 %v798, %v796
        %v1151 = vpack.c.b16 %v801, %v799
        %v1152 = vpack.c.b16 %v802, %v800
        %v1153 = vpack.c.b16 %v805, %v803
        %v1154 = vpack.c.b16 %v806, %v804
        %v1155 = vpack.c.b16 %v809, %v807
        %v1156 = vpack.c.b16 %v810, %v808
        %v1157 = vpack.c.b16 %v813, %v811
        %v1158 = vpack.c.b16 %v814, %v812
        %v1159 = vpack.c.b16 %v817, %v815
        %v1160 = vpack.c.b16 %v818, %v816
        %v1161 = vpack.c.b16 %v821, %v819
        %v1162 = vpack.c.b16 %v822, %v820
        %v1163 = vpack.c.b16 %v825, %v823
        %v1164 = vpack.c.b16 %v826, %v824
        %v1165 = vpack.c.b16 %v829, %v827
        %v1166 = vpack.c.b16 %v830, %v828
        %v1167 = vpack.c.b16 %v833, %v831
        %v1168 = vpack.c.b16 %v834, %v832
        %v1169 = vpack.c.b16 %v837, %v835
        %v1170 = vpack.c.b16 %v838, %v836
        %v1171 = vpack.c.b16 %v841, %v839
        %v1172 = vpack.c.b16 %v842, %v840
        %v1173 = vpack.c.b16 %v845, %v843
        %v1174 = vpack.c.b16 %v846, %v844
        %v1175 = vpack.c.b16 %v849, %v847
        %v1176 = vpack.c.b16 %v850, %v848
        %v1177 = vpack.c.b16 %v853, %v851
        %v1178 = vpack.c.b16 %v854, %v852
        %v1179 = vpack.c.b16 %v857, %v855
        %v1180 = vpack.c.b16 %v858, %v856
        %v1181 = vpack.c.b16 %v861, %v859
        %v1182 = vpack.c.b16 %v862, %v860
        %v1183 = vpack.c.b16 %v865, %v863
        %v1184 = vpack.c.b16 %v866, %v864
        %v1185 = vpack.c.b16 %v869, %v867
        %v1186 = vpack.c.b16 %v870, %v868
        %v1187 = vpack.c.b16 %v873, %v871
        %v1188 = vpack.c.b16 %v874, %v872
        %v1189 = vpack.c.b16 %v877, %v875
        %v1190 = vpack.c.b16 %v878, %v876
        %v1191 = vpack.c.b16 %v881, %v879
        %v1192 = vpack.c.b16 %v882, %v880
        %v1193 = vpack.c.b16 %v885, %v883
        %v1194 = vpack.c.b16 %v886, %v884
        %v1195 = vpack.c.b16 %v889, %v887
        %v1196 = vpack.c.b16 %v890, %v888
        %v1197 = vpack.c.b16 %v893, %v891
        %v1198 = vpack.c.b16 %v894, %v892
        %v1199 = vpack.c.b16 %v897, %v895
        %v1200 = vpack.c.b16 %v898, %v896
        %v1201 = vpack.c.b16 %v901, %v899
        %v1202 = vpack.c.b16 %v902, %v900
        %v1203 = vpack.c.b16 %v905, %v903
        %v1204 = vpack.c.b16 %v906, %v904
        %v1205 = vpack.c.b16 %v909, %v907
        %v1206 = vpack.c.b16 %v910, %v908
        %v1207 = vpack.c.b16 %v913, %v911
        %v1208 = vpack.c.b16 %v914, %v912
        %v1209 = vpack.c.b16 %v917, %v915
        %v1210 = vpack.c.b16 %v918, %v916
        %v1211 = vpack.c.b16 %v921, %v919
        %v1212 = vpack.c.b16 %v922, %v920
        %v1213 = vpack.c.b16 %v925, %v923
        %v1214 = vpack.c.b16 %v926, %v924
        %v1215 = vpack.c.b16 %v929, %v927
        %v1216 = vpack.c.b16 %v930, %v928
        %v1217 = vpack.c.b16 %v933, %v931
        %v1218 = vpack.c.b16 %v934, %v932
        %v1219 = vpack.c.b16 %v937, %v935
        %v1220 = vpack.c.b16 %v938, %v936
        %v1221 = vpack.c.b16 %v941, %v939
        %v1222 = vpack.c.b16 %v942, %v940
        %v1223 = vpack.c.b16 %v945, %v943
        %v1224 = vpack.c.b16 %v946, %v944
        %v1225 = vpack.c.b16 %v949, %v947
        %v1226 = vpack.c.b16 %v950, %v948
        %v1227 = vpack.c.b16 %v953, %v951
        %v1228 = vpack.c.b16 %v954, %v952
        %v1229 = vpack.c.b16 %v957, %v955
        %v1230 = vpack.c.b16 %v958, %v956
        %v1231 = vpack.c.b16 %v961, %v959
        %v1232 = vpack.c.b16 %v962, %v960
        %v1233 = vpack.c.b16 %v965, %v963
        %v1234 = vpack.c.b16 %v966, %v964
        %v1235 = vpack.c.b16 %v969, %v967
        %v1236 = vpack.c.b16 %v970, %v968
        %v1237 = vpack.c.b16 %v973, %v971
        %v1238 = vpack.c.b16 %v974, %v972
        %v1239 = vpack.c.b16 %v977, %v975
        %v1240 = vpack.c.b16 %v978, %v976
        %v1241 = vpack.c.b16 %v981, %v979
        %v1242 = vpack.c.b16 %v982, %v980
        %v1243 = vpack.c.b16 %v985, %v983
        %v1244 = vpack.c.b16 %v986, %v984
        %v1245 = vpack.c.b16 %v989, %v987
        %v1246 = vpack.c.b16 %v990, %v988
        %v1247 = vpack.c.b16 %v993, %v991
        %v1248 = vpack.c.b16 %v994, %v992
        %v1249 = vpack.c.b16 %v997, %v995
        %v1250 = vpack.c.b16 %v998, %v996
        %v1251 = vpack.c.b16 %v1001, %v999
        %v1252 = vpack.c.b16 %v1002, %v1000
        %v1253 = vpack.c.b16 %v1005, %v1003
        %v1254 = vpack.c.b16 %v1006, %v1004
        %v1255 = vpack.c.b16 %v1009, %v1007
        %v1256 = vpack.c.b16 %v1010, %v1008
        %v1257 = vpack.c.b16 %v1013, %v1011
        %v1258 = vpack.c.b16 %v1014, %v1012
        %v1259 = vpack.c.b16 %v1017, %v1015
        %v1260 = vpack.c.b16 %v1018, %v1016
        %v1261 = vpack.c.b16 %v1021, %v1019
        %v1262 = vpack.c.b16 %v1022, %v1020
        %v1263 = vpack.c.b16 %v1025, %v1023
        %v1264 = vpack.c.b16 %v1026, %v1024
        %v1265 = vpack.c.b16 %v1029, %v1027
        %v1266 = vpack.c.b16 %v1030, %v1028
        %v1267 = vpack.c.b16 %v1033, %v1031
        %v1268 = vpack.c.b16 %v1034, %v1032
        %v1269 = vpack.c.b16 %v1037, %v1035
        %v1270 = vpack.c.b16 %v1038, %v1036
        %v1271 = vpack.c.b16 %v1041, %v1039
        %v1272 = vpack.c.b16 %v1042, %v1040
        %v1273 = vpack.c.b16 %v1045, %v1043
        %v1274 = vpack.c.b16 %v1046, %v1044
        %v1275 = vpack.c.b16 %v1049, %v1047
        %v1276 = vpack.c.b16 %v1050, %v1048
        %v1277 = vpack.c.b16 %v1053, %v1051
        %v1278 = vpack.c.b16 %v1054, %v1052
        %v1279 = vpack.c.b16 %v1057, %v1055
        %v1280 = vpack.c.b16 %v1058, %v1056
        %v1281 = vpack.c.b16 %v1061, %v1059
        %v1282 = vpack.c.b16 %v1062, %v1060
        %v1283 = vpack.c.b16 %v1065, %v1063
        %v1284 = vpack.c.b16 %v1066, %v1064
        %v1285 = vpack.c.b16 %v1069, %v1067
        %v1286 = vpack.c.b16 %v1070, %v1068
        %v1287 = vpack.c.b16 %v1073, %v1071
        %v1288 = vpack.c.b16 %v1074, %v1072
        %v1289 = vpack.c.b16 %v1077, %v1075
        %v1290 = vpack.c.b16 %v1078, %v1076
        %v1291 = vpack.c.b16 %v1081, %v1079
        %v1292 = vpack.c.b16 %v1082, %v1080
        %v1293 = vpack.c.b16 %v1085, %v1083
        %v1294 = vpack.c.b16 %v1086, %v1084
        %v1295 = vpack.c.b16 %v1089, %v1087
        %v1296 = vpack.c.b16 %v1090, %v1088
        %v1297 = vpack.c.b16 %v1093, %v1091
        %v1298 = vpack.c.b16 %v1094, %v1092
        %v1299 = vpack.c.b16 %v1097, %v1095
        %v1300 = vpack.c.b16 %v1098, %v1096
        %v1301 = vpack.c.b16 %v1101, %v1099
        %v1302 = vpack.c.b16 %v1102, %v1100
        %v1303 = vpack.c.b16 %v1105, %v1103
        %v1304 = vpack.c.b16 %v1106, %v1104
        %v1305 = vpack.c.b16 %v1109, %v1107
        %v1306 = vpack.c.b16 %v1110, %v1108
        %v1307 = vpack.c.b16 %v1113, %v1111
        %v1308 = vpack.c.b16 %v1114, %v1112
        %v1309 = vpack.c.b16 %v1117, %v1115
        %v1310 = vpack.c.b16 %v1118, %v1116
        %1503 = vmatprep.subr.bf16.mxu0 %v1120
        %1504 = vmatpush1.bf16.msra.mxu0 %v1119
        %1505 = vmatprep.subr.bf16.mxu0 %v1122
        %1506 = vmatpush1.bf16.msra.mxu0 %v1121
        %1507 = vmatprep.subr.bf16.mxu0 %v1124
        %1508 = vmatpush1.bf16.msra.mxu0 %v1123
        %1509 = vmatprep.subr.bf16.mxu0 %v1126
        %1510 = vmatpush1.bf16.msra.mxu0 %v1125
        %1511 = vmatprep.subr.bf16.mxu0 %v1128
        %1512 = vmatpush1.bf16.msra.mxu0 %v1127
        %1513 = vmatprep.subr.bf16.mxu0 %v1130
        %1514 = vmatpush1.bf16.msra.mxu0 %v1129
        %1515 = vmatprep.subr.bf16.mxu0 %v1132
        %1516 = vmatpush1.bf16.msra.mxu0 %v1131
        %1517 = vmatprep.subr.bf16.mxu0 %v1134
        %1518 = vmatpush1.bf16.msra.mxu0 %v1133
        %1519 = vmatprep.subr.bf16.mxu0 %v1136
        %1520 = vmatpush1.bf16.msra.mxu0 %v1135
        %1521 = vmatprep.subr.bf16.mxu0 %v1138
        %1522 = vmatpush1.bf16.msra.mxu0 %v1137
        %1523 = vmatprep.subr.bf16.mxu0 %v1140
        %1524 = vmatpush1.bf16.msra.mxu0 %v1139
        %1525 = vmatprep.subr.bf16.mxu0 %v1142
        %1526 = vmatpush1.bf16.msra.mxu0 %v1141
        %1527 = vmatprep.subr.bf16.mxu0 %v1144
        %1528 = vmatpush1.bf16.msra.mxu0 %v1143
        %1529 = vmatprep.subr.bf16.mxu0 %v1146
        %1530 = vmatpush1.bf16.msra.mxu0 %v1145
        %1531 = vmatprep.subr.bf16.mxu0 %v1148
        %1532 = vmatpush1.bf16.msra.mxu0 %v1147
        %1533 = vmatprep.subr.bf16.mxu0 %v1150
        %1534 = vmatpush1.bf16.msra.mxu0 %v1149
        %1535 = vmatprep.mubr.bf16.mxu0 %v520
        %1536 = vmatmul.mubr.bf16.gmra.mrb[0].mxu0 %v519
        %v1537 = vpop.f32.mrb[0].mxu0
        %v1538 = vadd.f32 %v479, %v1537
        %v1539 = vpop.f32.mrb[0].mxu0
        %v1540 = vadd.f32 %v480, %v1539
        %v1541 = vpop.f32.mrb[0].mxu0
        %v1542 = vadd.f32 %v481, %v1541
        %v1543 = vpop.f32.mrb[0].mxu0
        %v1544 = vadd.f32 %v482, %v1543
        %1545 = vdwg.mxu0
        %1546 = vmatprep.subr.bf16.mxu0 %v1152
        %1547 = vmatpush1.bf16.msra.mxu0 %v1151
        %1548 = vmatprep.subr.bf16.mxu0 %v1154
        %1549 = vmatpush1.bf16.msra.mxu0 %v1153
        %1550 = vmatprep.subr.bf16.mxu0 %v1156
        %1551 = vmatpush1.bf16.msra.mxu0 %v1155
        %1552 = vmatprep.subr.bf16.mxu0 %v1158
        %1553 = vmatpush1.bf16.msra.mxu0 %v1157
        %1554 = vmatprep.subr.bf16.mxu0 %v1160
        %1555 = vmatpush1.bf16.msra.mxu0 %v1159
        %1556 = vmatprep.subr.bf16.mxu0 %v1162
        %1557 = vmatpush1.bf16.msra.mxu0 %v1161
        %1558 = vmatprep.subr.bf16.mxu0 %v1164
        %1559 = vmatpush1.bf16.msra.mxu0 %v1163
        %1560 = vmatprep.subr.bf16.mxu0 %v1166
        %1561 = vmatpush1.bf16.msra.mxu0 %v1165
        %1562 = vmatprep.subr.bf16.mxu0 %v1168
        %1563 = vmatpush1.bf16.msra.mxu0 %v1167
        %1564 = vmatprep.subr.bf16.mxu0 %v1170
        %1565 = vmatpush1.bf16.msra.mxu0 %v1169
        %1566 = vmatprep.subr.bf16.mxu0 %v1172
        %1567 = vmatpush1.bf16.msra.mxu0 %v1171
        %1568 = vmatprep.subr.bf16.mxu0 %v1174
        %1569 = vmatpush1.bf16.msra.mxu0 %v1173
        %1570 = vmatprep.subr.bf16.mxu0 %v1176
        %1571 = vmatpush1.bf16.msra.mxu0 %v1175
        %1572 = vmatprep.subr.bf16.mxu0 %v1178
        %1573 = vmatpush1.bf16.msra.mxu0 %v1177
        %1574 = vmatprep.subr.bf16.mxu0 %v1180
        %1575 = vmatpush1.bf16.msra.mxu0 %v1179
        %1576 = vmatprep.subr.bf16.mxu0 %v1182
        %1577 = vmatpush1.bf16.msra.mxu0 %v1181
        %1578 = vmatprep.mubr.bf16.mxu0 %v522
        %1579 = vmatmul.mubr.bf16.gmra.mrb[0].mxu0 %v521
        %v1580 = vpop.f32.mrb[0].mxu0
        %v1581 = vadd.f32 %v1538, %v1580
        %v1582 = vpop.f32.mrb[0].mxu0
        %v1583 = vadd.f32 %v1540, %v1582
        %v1584 = vpop.f32.mrb[0].mxu0
        %v1585 = vadd.f32 %v1542, %v1584
        %v1586 = vpop.f32.mrb[0].mxu0
        %v1587 = vadd.f32 %v1544, %v1586
        %1588 = vdwg.mxu0
        %1589 = vmatprep.subr.bf16.mxu0 %v1184
        %1590 = vmatpush1.bf16.msra.mxu0 %v1183
        %1591 = vmatprep.subr.bf16.mxu0 %v1186
        %1592 = vmatpush1.bf16.msra.mxu0 %v1185
        %1593 = vmatprep.subr.bf16.mxu0 %v1188
        %1594 = vmatpush1.bf16.msra.mxu0 %v1187
        %1595 = vmatprep.subr.bf16.mxu0 %v1190
        %1596 = vmatpush1.bf16.msra.mxu0 %v1189
        %1597 = vmatprep.subr.bf16.mxu0 %v1192
        %1598 = vmatpush1.bf16.msra.mxu0 %v1191
        %1599 = vmatprep.subr.bf16.mxu0 %v1194
        %1600 = vmatpush1.bf16.msra.mxu0 %v1193
        %1601 = vmatprep.subr.bf16.mxu0 %v1196
        %1602 = vmatpush1.bf16.msra.mxu0 %v1195
        %1603 = vmatprep.subr.bf16.mxu0 %v1198
        %1604 = vmatpush1.bf16.msra.mxu0 %v1197
        %1605 = vmatprep.subr.bf16.mxu0 %v1200
        %1606 = vmatpush1.bf16.msra.mxu0 %v1199
        %1607 = vmatprep.subr.bf16.mxu0 %v1202
        %1608 = vmatpush1.bf16.msra.mxu0 %v1201
        %1609 = vmatprep.subr.bf16.mxu0 %v1204
        %1610 = vmatpush1.bf16.msra.mxu0 %v1203
        %1611 = vmatprep.subr.bf16.mxu0 %v1206
        %1612 = vmatpush1.bf16.msra.mxu0 %v1205
        %1613 = vmatprep.subr.bf16.mxu0 %v1208
        %1614 = vmatpush1.bf16.msra.mxu0 %v1207
        %1615 = vmatprep.subr.bf16.mxu0 %v1210
        %1616 = vmatpush1.bf16.msra.mxu0 %v1209
        %1617 = vmatprep.subr.bf16.mxu0 %v1212
        %1618 = vmatpush1.bf16.msra.mxu0 %v1211
        %1619 = vmatprep.subr.bf16.mxu0 %v1214
        %1620 = vmatpush1.bf16.msra.mxu0 %v1213
        %1621 = vmatprep.mubr.bf16.mxu0 %v524
        %1622 = vmatmul.mubr.bf16.gmra.mrb[0].mxu0 %v523
        %v1623 = vpop.f32.mrb[0].mxu0
        %v1624 = vadd.f32 %v1581, %v1623
        %v1625 = vpop.f32.mrb[0].mxu0
        %v1626 = vadd.f32 %v1583, %v1625
        %v1627 = vpop.f32.mrb[0].mxu0
        %v1628 = vadd.f32 %v1585, %v1627
        %v1629 = vpop.f32.mrb[0].mxu0
        %v1630 = vadd.f32 %v1587, %v1629
        %1631 = vdwg.mxu0
        %1632 = vmatprep.subr.bf16.mxu0 %v1216
        %1633 = vmatpush1.bf16.msra.mxu0 %v1215
        %1634 = vmatprep.subr.bf16.mxu0 %v1218
        %1635 = vmatpush1.bf16.msra.mxu0 %v1217
        %1636 = vmatprep.subr.bf16.mxu0 %v1220
        %1637 = vmatpush1.bf16.msra.mxu0 %v1219
        %1638 = vmatprep.subr.bf16.mxu0 %v1222
        %1639 = vmatpush1.bf16.msra.mxu0 %v1221
        %1640 = vmatprep.subr.bf16.mxu0 %v1224
        %1641 = vmatpush1.bf16.msra.mxu0 %v1223
        %1642 = vmatprep.subr.bf16.mxu0 %v1226
        %1643 = vmatpush1.bf16.msra.mxu0 %v1225
        %1644 = vmatprep.subr.bf16.mxu0 %v1228
        %1645 = vmatpush1.bf16.msra.mxu0 %v1227
        %1646 = vmatprep.subr.bf16.mxu0 %v1230
        %1647 = vmatpush1.bf16.msra.mxu0 %v1229
        %1648 = vmatprep.subr.bf16.mxu0 %v1232
        %1649 = vmatpush1.bf16.msra.mxu0 %v1231
        %1650 = vmatprep.subr.bf16.mxu0 %v1234
        %1651 = vmatpush1.bf16.msra.mxu0 %v1233
        %1652 = vmatprep.subr.bf16.mxu0 %v1236
        %1653 = vmatpush1.bf16.msra.mxu0 %v1235
        %1654 = vmatprep.subr.bf16.mxu0 %v1238
        %1655 = vmatpush1.bf16.msra.mxu0 %v1237
        %1656 = vmatprep.subr.bf16.mxu0 %v1240
        %1657 = vmatpush1.bf16.msra.mxu0 %v1239
        %1658 = vmatprep.subr.bf16.mxu0 %v1242
        %1659 = vmatpush1.bf16.msra.mxu0 %v1241
        %1660 = vmatprep.subr.bf16.mxu0 %v1244
        %1661 = vmatpush1.bf16.msra.mxu0 %v1243
        %1662 = vmatprep.subr.bf16.mxu0 %v1246
        %1663 = vmatpush1.bf16.msra.mxu0 %v1245
        %1664 = vmatprep.mubr.bf16.mxu0 %v526
        %1665 = vmatmul.mubr.bf16.gmra.mrb[0].mxu0 %v525
        %v1666 = vpop.f32.mrb[0].mxu0
        %v1667 = vadd.f32 %v1624, %v1666
        %v1668 = vpop.f32.mrb[0].mxu0
        %v1669 = vadd.f32 %v1626, %v1668
        %v1670 = vpop.f32.mrb[0].mxu0
        %v1671 = vadd.f32 %v1628, %v1670
        %v1672 = vpop.f32.mrb[0].mxu0
        %v1673 = vadd.f32 %v1630, %v1672
        %1674 = vdwg.mxu0
        %1675 = vmatprep.subr.bf16.mxu0 %v1248
        %1676 = vmatpush1.bf16.msra.mxu0 %v1247
        %1677 = vmatprep.subr.bf16.mxu0 %v1250
        %1678 = vmatpush1.bf16.msra.mxu0 %v1249
        %1679 = vmatprep.subr.bf16.mxu0 %v1252
        %1680 = vmatpush1.bf16.msra.mxu0 %v1251
        %1681 = vmatprep.subr.bf16.mxu0 %v1254
        %1682 = vmatpush1.bf16.msra.mxu0 %v1253
        %1683 = vmatprep.subr.bf16.mxu0 %v1256
        %1684 = vmatpush1.bf16.msra.mxu0 %v1255
        %1685 = vmatprep.subr.bf16.mxu0 %v1258
        %1686 = vmatpush1.bf16.msra.mxu0 %v1257
        %1687 = vmatprep.subr.bf16.mxu0 %v1260
        %1688 = vmatpush1.bf16.msra.mxu0 %v1259
        %1689 = vmatprep.subr.bf16.mxu0 %v1262
        %1690 = vmatpush1.bf16.msra.mxu0 %v1261
        %1691 = vmatprep.subr.bf16.mxu0 %v1264
        %1692 = vmatpush1.bf16.msra.mxu0 %v1263
        %1693 = vmatprep.subr.bf16.mxu0 %v1266
        %1694 = vmatpush1.bf16.msra.mxu0 %v1265
        %1695 = vmatprep.subr.bf16.mxu0 %v1268
        %1696 = vmatpush1.bf16.msra.mxu0 %v1267
        %1697 = vmatprep.subr.bf16.mxu0 %v1270
        %1698 = vmatpush1.bf16.msra.mxu0 %v1269
        %1699 = vmatprep.subr.bf16.mxu0 %v1272
        %1700 = vmatpush1.bf16.msra.mxu0 %v1271
        %1701 = vmatprep.subr.bf16.mxu0 %v1274
        %1702 = vmatpush1.bf16.msra.mxu0 %v1273
        %1703 = vmatprep.subr.bf16.mxu0 %v1276
        %1704 = vmatpush1.bf16.msra.mxu0 %v1275
        %1705 = vmatprep.subr.bf16.mxu0 %v1278
        %1706 = vmatpush1.bf16.msra.mxu0 %v1277
        %1707 = vmatprep.mubr.bf16.mxu0 %v528
        %1708 = vmatmul.mubr.bf16.gmra.mrb[0].mxu0 %v527
        %v1709 = vpop.f32.mrb[0].mxu0
        %v1710 = vadd.f32 %v1667, %v1709
        %v1711 = vpop.f32.mrb[0].mxu0
        %v1712 = vadd.f32 %v1669, %v1711
        %v1713 = vpop.f32.mrb[0].mxu0
        %v1714 = vadd.f32 %v1671, %v1713
        %v1715 = vpop.f32.mrb[0].mxu0
        %v1716 = vadd.f32 %v1673, %v1715
        %1717 = vdwg.mxu0
        %1718 = vmatprep.subr.bf16.mxu0 %v1280
        %1719 = vmatpush1.bf16.msra.mxu0 %v1279
        %1720 = vmatprep.subr.bf16.mxu0 %v1282
        %1721 = vmatpush1.bf16.msra.mxu0 %v1281
        %1722 = vmatprep.subr.bf16.mxu0 %v1284
        %1723 = vmatpush1.bf16.msra.mxu0 %v1283
        %1724 = vmatprep.subr.bf16.mxu0 %v1286
        %1725 = vmatpush1.bf16.msra.mxu0 %v1285
        %1726 = vmatprep.subr.bf16.mxu0 %v1288
        %1727 = vmatpush1.bf16.msra.mxu0 %v1287
        %1728 = vmatprep.subr.bf16.mxu0 %v1290
        %1729 = vmatpush1.bf16.msra.mxu0 %v1289
        %1730 = vmatprep.subr.bf16.mxu0 %v1292
        %1731 = vmatpush1.bf16.msra.mxu0 %v1291
        %1732 = vmatprep.subr.bf16.mxu0 %v1294
        %1733 = vmatpush1.bf16.msra.mxu0 %v1293
        %1734 = vmatprep.subr.bf16.mxu0 %v1296
        %1735 = vmatpush1.bf16.msra.mxu0 %v1295
        %1736 = vmatprep.subr.bf16.mxu0 %v1298
        %1737 = vmatpush1.bf16.msra.mxu0 %v1297
        %1738 = vmatprep.subr.bf16.mxu0 %v1300
        %1739 = vmatpush1.bf16.msra.mxu0 %v1299
        %1740 = vmatprep.subr.bf16.mxu0 %v1302
        %1741 = vmatpush1.bf16.msra.mxu0 %v1301
        %1742 = vmatprep.subr.bf16.mxu0 %v1304
        %1743 = vmatpush1.bf16.msra.mxu0 %v1303
        %1744 = vmatprep.subr.bf16.mxu0 %v1306
        %1745 = vmatpush1.bf16.msra.mxu0 %v1305
        %1746 = vmatprep.subr.bf16.mxu0 %v1308
        %1747 = vmatpush1.bf16.msra.mxu0 %v1307
        %1748 = vmatprep.subr.bf16.mxu0 %v1310
        %1749 = vmatpush1.bf16.msra.mxu0 %v1309
        %1750 = vmatprep.mubr.bf16.mxu0 %v530
        %1751 = vmatmul.mubr.bf16.gmra.mrb[0].mxu0 %v529
        %v1752 = vpop.f32.mrb[0].mxu0
        %v1753 = vadd.f32 %v1710, %v1752
        %v1754 = vpop.f32.mrb[0].mxu0
        %v1755 = vadd.f32 %v1712, %v1754
        %v1756 = vpop.f32.mrb[0].mxu0
        %v1757 = vadd.f32 %v1714, %v1756
        %v1758 = vpop.f32.mrb[0].mxu0
        %v1759 = vadd.f32 %v1716, %v1758
        %1760 = vdwg.mxu0
        %1761 = vst [vmem:[%s268] sm:$0xff] %v1753
        %1762 = vst [vmem:[%s268 + $0x8] sm:$0xff] %v1755
        %1763 = vst [vmem:[%s268 + $0x10] sm:$0xff] %v1757
        %1764 = vst [vmem:[%s268 + $0x18] sm:$0xff] %v1759
        %s1765 = sand.u32 %s123, 1
        %s1766 = scalar_lea.sflag [#allocation4], %s1765
        %s1767 = sand.u32 %s123, 1
        %s1768 = smul.addr %s1767, 32
        %s1769 = scalar_lea.vmem [#allocation8], %s1768
        // Predicated region
        $region45: #{tpu_custom_call.1} parent=31 // pred_check
          %p1770 = pneg %p133
        $region46: #{tpu_custom_call.1} parent=31 // pred_check_branch
          %1772 = sbr.rel (%p1770) target = $region48
        $region47: #{tpu_custom_call.1} parent=31 // pred_region
          %s1773 = smul.u32 2, %s25
          %s1774 = smul.u32 2, %s26
          %s1776 = ssub.s32 512, 512
          %1777 = vsyncadd %s1766, %s1776
          %s1778 = smul.addr %s1773, 4
          %s1779 = sadd.s32 %s1774, %s1778
          %s1780 = smul.addr %s1779, 128
          %s1781 = scalar_lea.hbm %s3, %s1780
          %s1782 = sshll.u32 %s1769, 4
          %s1783 = int_to_ptr.vmem [resolvable:$true] %s1782
          %1788 = dma.vmem_to_hbm [thread:$0]  %s1783, 512, %s1781, %s1766, 256, 512, 16
        $region48: #{tpu_custom_call.1} parent=31 // pred_fallthru
          _
      $region32: #{tpu_custom_call.1} parent=5 // pred_fallthru
        _
      %p1789 = scmp.le.s32.totalorder 2, %s16
      // Predicated region
      $region49: #{tpu_custom_call.1} parent=5 // pred_check
        %p1790 = pneg %p1789
      $region50: #{tpu_custom_call.1} parent=5 // pred_check_branch
        %1792 = sbr.rel (%p1790) target = $region52
      $region51: #{tpu_custom_call.1} parent=5 // pred_region
        %s1793 = ssub.s32 %s16, 2
        // Predicated region
        $region53: #{tpu_custom_call.1} parent=51 // pred_check
          %p1794 = pneg %p139
        $region54: #{tpu_custom_call.1} parent=51 // pred_check_branch
          %1796 = sbr.rel (%p1794) target = $region56
        $region55: #{tpu_custom_call.1} parent=51 // pred_region
          %s1797 = sand.u32 %s124, 1
          %s1798 = scalar_lea.sflag [#allocation4], %s1797
          %s1799 = sand.u32 %s124, 1
          %s1800 = smul.addr %s1799, 32
          %s1801 = scalar_lea.vmem [#allocation8], %s1800
          %1802 = dma.done %s1798, 512
        $region56: #{tpu_custom_call.1} parent=51 // pred_fallthru
          _
      $region52: #{tpu_custom_call.1} parent=5 // pred_fallthru
        _
    $region6: #{tpu_custom_call.1} parent=1 // loop_footer
      %s20 = sadd.s32 1, %s16
    $region7: #{tpu_custom_call.1} parent=1 // loop_footer_branch
      %15 = sbr.rel target = $region3
    $region8: #{tpu_custom_call.1} parent=1 // loop_exit
      _
    %1803 = vsyncpa [#allocation3], 1
    %s1804 = scalar_lea.sflag [#allocation3], 1
    %1805 = vsyncpa %s1804, 1
    %1806 = vsyncpa [#allocation6], 1
    %s1807 = scalar_lea.sflag [#allocation6], 1
    %1808 = vsyncpa %s1807, 1
    %1809 = vsyncpa [#allocation4], 1
    %s1810 = scalar_lea.sflag [#allocation4], 1
    %1811 = vsyncpa %s1810, 1

</llo_original>
